<compile_context>
chip_gen: v6e
topology: v6e:2x2x1
jax: 0.10.0
libtpu: 0.0.40
codegen_flags: <defaults>
</compile_context>

<pallas_src>
import functools
import math

import jax
import jax.numpy as jnp
from jax import lax
from jax.experimental import pallas as pl
from jax.experimental.pallas import tpu as pltpu

NEG_INF = -1e9          # exp() underflows to exactly 0 -> same softmax as -inf
LN_EPS = 1e-5


# ---------------------------------------------------------------------------
# Pallas kernels
# ---------------------------------------------------------------------------

def pe_add_kernel(x_ref, pe_ref, out_ref, *, alpha):
    """out = x * alpha + pe   (Embeddings scale fused with PositionalEncoding).
    Dropout of the module is identity in eval mode."""
    x = x_ref[0].astype(jnp.float32)                         # (N, D)
    out_ref[0] = (x * alpha + pe_ref[...]).astype(out_ref.dtype)


def mha_addnorm_kernel(xq_ref, xkv_ref, mask_ref,
                       wq_ref, bq_ref, wk_ref, bk_ref, wv_ref, bv_ref,
                       wo_ref, bo_ref, g_ref, b_ref, out_ref,
                       *, num_heads, eps):
    """MultiheadAttention sub-layer fused with residual + LayerNorm:
       out = LN(xq + out_proj(softmax(Q K^T * scale + mask) V))
    Weights arrive pre-transposed: kernel computes x @ W (MXU), no .T in-kernel.
    """
    xq = xq_ref[0].astype(jnp.float32)                       # (qN, D)
    xkv = xkv_ref[0].astype(jnp.float32)                     # (kN, D)
    qN, D = xq.shape
    hd = D // num_heads
    scale = 1.0 / math.sqrt(hd)

    q = jnp.dot(xq, wq_ref[...], preferred_element_type=jnp.float32) + bq_ref[...]
    k = jnp.dot(xkv, wk_ref[...], preferred_element_type=jnp.float32) + bk_ref[...]
    v = jnp.dot(xkv, wv_ref[...], preferred_element_type=jnp.float32) + bv_ref[...]

    mask = mask_ref[...]                                     # (qN, kN)
    heads = []
    for h in range(num_heads):                               # static unroll
        sl = slice(h * hd, (h + 1) * hd)
        qh, kh, vh = q[:, sl], k[:, sl], v[:, sl]
        s = lax.dot_general(qh, kh, (((1,), (1,)), ((), ())),
                            preferred_element_type=jnp.float32) * scale + mask
        m = jnp.max(s, axis=-1, keepdims=True)
        e = jnp.exp(s - m)
        p = e / jnp.sum(e, axis=-1, keepdims=True)
        heads.append(jnp.dot(p, vh, preferred_element_type=jnp.float32))
    ctx = jnp.concatenate(heads, axis=-1)                    # (qN, D)
    y = jnp.dot(ctx, wo_ref[...], preferred_element_type=jnp.float32) + bo_ref[...]

    y = xq + y                                               # residual
    mu = jnp.mean(y, axis=-1, keepdims=True)
    var = jnp.mean(jnp.square(y - mu), axis=-1, keepdims=True)
    y = (y - mu) * lax.rsqrt(var + eps)
    out_ref[0] = (y * g_ref[...] + b_ref[...]).astype(out_ref.dtype)


def ffn_addnorm_kernel(x_ref, w1_ref, b1_ref, w2_ref, b2_ref, g_ref, b_ref,
                       out_ref, *, eps):
    """Mlp (fc1 -> ReLU -> fc2) fused with residual + LayerNorm."""
    x = x_ref[0].astype(jnp.float32)                         # (N, D)
    h = jnp.dot(x, w1_ref[...], preferred_element_type=jnp.float32) + b1_ref[...]
    h = jnp.maximum(h, 0.0)
    y = jnp.dot(h, w2_ref[...], preferred_element_type=jnp.float32) + b2_ref[...]
    y = x + y
    mu = jnp.mean(y, axis=-1, keepdims=True)
    var = jnp.mean(jnp.square(y - mu), axis=-1, keepdims=True)
    y = (y - mu) * lax.rsqrt(var + eps)
    out_ref[0] = (y * g_ref[...] + b_ref[...]).astype(out_ref.dtype)


def proj_softmax_kernel(x_ref, w_ref, out_ref):
    """word_prob = softmax(x @ Wprj)   (tgt_word_prj + softmax, lane-dense V)."""
    logits = jnp.dot(x_ref[...].astype(jnp.float32), w_ref[...],
                     preferred_element_type=jnp.float32)
    m = jnp.max(logits, axis=-1, keepdims=True)
    e = jnp.exp(logits - m)
    out_ref[...] = (e / jnp.sum(e, axis=-1, keepdims=True)).astype(out_ref.dtype)


# ---------------------------------------------------------------------------
# pallas_call wrappers
# ---------------------------------------------------------------------------

_PARALLEL_1D = pltpu.CompilerParams(dimension_semantics=("parallel",))


def _batch_spec(n, d):
    return pl.BlockSpec((1, n, d), lambda b: (b, 0, 0))


def _full_spec(shape):
    rank = len(shape)
    return pl.BlockSpec(shape, lambda b: (0,) * rank)


def pe_add(x, pe, alpha):
    B, N, D = x.shape
    return pl.pallas_call(
        functools.partial(pe_add_kernel, alpha=alpha),
        out_shape=jax.ShapeDtypeStruct((B, N, D), x.dtype),
        grid=(B,),
        in_specs=[_batch_spec(N, D), _full_spec((N, D))],
        out_specs=_batch_spec(N, D),
        compiler_params=_PARALLEL_1D,
    )(x, pe)


def mha_addnorm(xq, xkv, mask, p, num_heads):
    B, qN, D = xq.shape
    kN = xkv.shape[1]
    return pl.pallas_call(
        functools.partial(mha_addnorm_kernel, num_heads=num_heads, eps=LN_EPS),
        out_shape=jax.ShapeDtypeStruct((B, qN, D), xq.dtype),
        grid=(B,),
        in_specs=[
            _batch_spec(qN, D), _batch_spec(kN, D), _full_spec((qN, kN)),
            _full_spec((D, D)), _full_spec((1, D)),      # wq, bq
            _full_spec((D, D)), _full_spec((1, D)),      # wk, bk
            _full_spec((D, D)), _full_spec((1, D)),      # wv, bv
            _full_spec((D, D)), _full_spec((1, D)),      # wo, bo
            _full_spec((1, D)), _full_spec((1, D)),      # LN gamma, beta
        ],
        out_specs=_batch_spec(qN, D),
        compiler_params=_PARALLEL_1D,
    )(xq, xkv, mask,
      p["wq"], p["bq"], p["wk"], p["bk"], p["wv"], p["bv"],
      p["wo"], p["bo"], p["gamma"], p["beta"])


def ffn_addnorm(x, p):
    B, N, D = x.shape
    F = p["w1"].shape[1]
    return pl.pallas_call(
        functools.partial(ffn_addnorm_kernel, eps=LN_EPS),
        out_shape=jax.ShapeDtypeStruct((B, N, D), x.dtype),
        grid=(B,),
        in_specs=[
            _batch_spec(N, D),
            _full_spec((D, F)), _full_spec((1, F)),
            _full_spec((F, D)), _full_spec((1, D)),
            _full_spec((1, D)), _full_spec((1, D)),
        ],
        out_specs=_batch_spec(N, D),
        compiler_params=_PARALLEL_1D,
    )(x, p["w1"], p["b1"], p["w2"], p["b2"], p["gamma"], p["beta"])


def proj_softmax(x, w_t):
    B, D = x.shape
    V = w_t.shape[1]
    vmem = pl.BlockSpec(memory_space=pltpu.MemorySpace.VMEM)
    return pl.pallas_call(
        proj_softmax_kernel,
        out_shape=jax.ShapeDtypeStruct((B, V), x.dtype),
        in_specs=[vmem, vmem],
        out_specs=vmem,
    )(x, w_t)


# ---------------------------------------------------------------------------
# Model forward (eval mode, == forward_test)
# ---------------------------------------------------------------------------

def causal_mask(n):
    r = jnp.arange(n)
    return jnp.where(r[:, None] >= r[None, :], 0.0, NEG_INF).astype(jnp.float32)


def encode(src, params, nhead):
    """PositionalEncoding + encoder stack (TransformerBlock: self-attn + MLP)."""
    B, sN, D = src.shape
    x = pe_add(src, params["pe"][:sN], alpha=1.0)
    zero_mask = jnp.zeros((sN, sN), jnp.float32)
    for layer in params["encoder"]:
        x = mha_addnorm(x, x, zero_mask, layer["self"], nhead)
        x = ffn_addnorm(x, layer["ffn"])
    return x


def decode_step_probs(dec_seq, pos, memory, params, nhead):
    """Embedding + PE + decoder stack on the max_len-padded sequence; returns
    softmax(tgt_word_prj(hidden[:, pos])).  The causal mask makes padded
    positions > pos irrelevant, so every greedy step reuses the same kernels."""
    B, Lpad = dec_seq.shape
    sN, D = memory.shape[1], memory.shape[2]
    # TODO(synk): embedding-table gather is plain-JAX glue (a scalar-prefetch
    # pl.Element row-gather kernel would be the Pallas-native alternative).
    emb = jnp.take(params["embedding"], dec_seq, axis=0)        # (B, Lpad, D)
    tgt = pe_add(emb, params["pe"][:Lpad], alpha=math.sqrt(D))  # scale + PE
    self_mask = causal_mask(Lpad)
    cross_mask = jnp.zeros((Lpad, sN), jnp.float32)
    for layer in params["decoder"]:
        tgt = mha_addnorm(tgt, tgt, self_mask, layer["self"], nhead)
        tgt = mha_addnorm(tgt, memory, cross_mask, layer["cross"], nhead)
        tgt = ffn_addnorm(tgt, layer["ffn"])
    last = jnp.take(tgt, pos, axis=1)                           # (B, D)
    return proj_softmax(last, params["wprj_t"])


# ---------------------------------------------------------------------------
# Parameters (deterministic init mirroring the module's __init__ / _init_weights)
# ---------------------------------------------------------------------------

def make_pe_table(max_len, dim):
    pos = jnp.arange(max_len, dtype=jnp.float32)[:, None]
    div = jnp.exp(jnp.arange(0, dim, 2, dtype=jnp.float32)
                  * (-math.log(10000.0) / dim))
    pe = jnp.zeros((max_len, dim), jnp.float32)
    pe = pe.at[:, 0::2].set(jnp.sin(pos * div))
    pe = pe.at[:, 1::2].set(jnp.cos(pos * div))
    return pe


def _xavier(key, out_f, in_f):
    std = math.sqrt(2.0 / (in_f + out_f))
    return std * jax.random.normal(key, (out_f, in_f), jnp.float32)


def _attn_params(key, d, self_attn):
    k1, k2, k3 = jax.random.split(key, 3)
    if self_attn:                       # nn.Linear(d, 3d), sliced like the qkv view
        wqkv = _xavier(k1, 3 * d, d)
        wq, wk, wv = wqkv[:d], wqkv[d:2 * d], wqkv[2 * d:]
    else:                               # q: Linear(d, d); kv: Linear(d, 2d)
        wq = _xavier(k1, d, d)
        wkv = _xavier(k2, 2 * d, d)
        wk, wv = wkv[:d], wkv[d:]
    wo = _xavier(k3, d, d)
    zeros = jnp.zeros((1, d), jnp.float32)        # biases zero-init (xavier hook)
    return dict(wq=wq.T, bq=zeros, wk=wk.T, bk=zeros, wv=wv.T, bv=zeros,
                wo=wo.T, bo=zeros,
                gamma=jnp.ones((1, d), jnp.float32),
                beta=jnp.zeros((1, d), jnp.float32))


def _ffn_params(key, d, dff):
    k1, k2 = jax.random.split(key)
    return dict(w1=_xavier(k1, dff, d).T, b1=jnp.zeros((1, dff), jnp.float32),
                w2=_xavier(k2, d, dff).T, b2=jnp.zeros((1, d), jnp.float32),
                gamma=jnp.ones((1, d), jnp.float32),
                beta=jnp.zeros((1, d), jnp.float32))


def init_params(key, *, d_model, num_encoder_layers, num_decoder_layers,
                dim_feedforward, vocab, pe_len):
    keys = iter(jax.random.split(
        key, 2 + 2 * num_encoder_layers + 3 * num_decoder_layers))
    emb = jax.random.normal(next(keys), (vocab, d_model), jnp.float32)
    emb = emb.at[0].set(0.0)                      # padding_idx = 0
    encoder = [dict(self=_attn_params(next(keys), d_model, True),
                    ffn=_ffn_params(next(keys), d_model, dim_feedforward))
               for _ in range(num_encoder_layers)]
    decoder = [dict(self=_attn_params(next(keys), d_model, True),
                    cross=_attn_params(next(keys), d_model, False),
                    ffn=_ffn_params(next(keys), d_model, dim_feedforward))
               for _ in range(num_decoder_layers)]
    wprj = _xavier(next(keys), vocab, d_model)    # tgt_word_prj (V, D), no bias
    return dict(embedding=emb, encoder=encoder, decoder=decoder,
                wprj_t=wprj.T, pe=make_pe_table(pe_len, d_model))


# ---------------------------------------------------------------------------
# Pure-JAX reference (for validation only)
# ---------------------------------------------------------------------------

def _ref_layernorm(x, g, b):
    mu = x.mean(-1, keepdims=True)
    var = ((x - mu) ** 2).mean(-1, keepdims=True)
    return (x - mu) / jnp.sqrt(var + LN_EPS) * g + b


def _ref_mha_addnorm(xq, xkv, mask, p, nh):
    B, qN, D = xq.shape
    kN = xkv.shape[1]
    hd = D // nh
    q = (xq @ p["wq"] + p["bq"]).reshape(B, qN, nh, hd).transpose(0, 2, 1, 3)
    k = (xkv @ p["wk"] + p["bk"]).reshape(B, kN, nh, hd).transpose(0, 2, 1, 3)
    v = (xkv @ p["wv"] + p["bv"]).reshape(B, kN, nh, hd).transpose(0, 2, 1, 3)
    attn = q @ jnp.swapaxes(k, -1, -2) * (hd ** -0.5) + mask
    attn = jax.nn.softmax(attn, axis=-1)
    ctx = (attn @ v).transpose(0, 2, 1, 3).reshape(B, qN, D)
    return _ref_layernorm(xq + ctx @ p["wo"] + p["bo"], p["gamma"], p["beta"])


def _ref_ffn_addnorm(x, p):
    h = jax.nn.relu(x @ p["w1"] + p["b1"])
    return _ref_layernorm(x + h @ p["w2"] + p["b2"], p["gamma"], p["beta"])


def _ref_encode(src, params, nhead):
    sN = src.shape[1]
    x = src + params["pe"][:sN]
    zm = jnp.zeros((sN, sN), jnp.float32)
    for layer in params["encoder"]:
        x = _ref_mha_addnorm(x, x, zm, layer["self"], nhead)
        x = _ref_ffn_addnorm(x, layer["ffn"])
    return x


def _ref_step_probs(dec_seq, pos, memory, params, nhead):
    B, Lpad = dec_seq.shape
    sN, D = memory.shape[1], memory.shape[2]
    tgt = (jnp.take(params["embedding"], dec_seq, axis=0) * math.sqrt(D)
           + params["pe"][:Lpad])
    sm = causal_mask(Lpad)
    cm = jnp.zeros((Lpad, sN), jnp.float32)
    for layer in params["decoder"]:
        tgt = _ref_mha_addnorm(tgt, tgt, sm, layer["self"], nhead)
        tgt = _ref_mha_addnorm(tgt, memory, cm, layer["cross"], nhead)
        tgt = _ref_ffn_addnorm(tgt, layer["ffn"])
    logits = tgt[:, pos, :] @ params["wprj_t"]
    return jax.nn.softmax(logits, axis=-1)


# ---------------------------------------------------------------------------
# Main
# ---------------------------------------------------------------------------

if __name__ == "__main__":
    # Small toy config consistent with the module
    # (production: d_model=512, nhead=8, 6+6 layers, dim_feedforward=1024).
    B, sN = 2, 8
    d_model, nhead = 32, 4
    num_encoder_layers, num_decoder_layers = 1, 2
    dim_feedforward = 64
    max_len = 5
    out_channels = 127                      # vocab = 128 -> lane-dense logits
    vocab = out_channels + 1
    pe_len = 64

    key = jax.random.PRNGKey(0)
    kp, kx = jax.random.split(key)
    params = init_params(kp, d_model=d_model,
                         num_encoder_layers=num_encoder_layers,
                         num_decoder_layers=num_decoder_layers,
                         dim_feedforward=dim_feedforward,
                         vocab=vocab, pe_len=pe_len)
    assert params["pe"].shape[0] >= max(sN, max_len)   # PE table long enough
    src = jax.random.normal(kx, (B, sN, d_model), jnp.float32)

    enc_fn = jax.jit(lambda s: encode(s, params, nhead))
    step_fn = jax.jit(lambda ds, pos, mem: decode_step_probs(ds, pos, mem,
                                                             params, nhead))

    # --- eval-mode forward == forward_test (greedy decode) ------------------
    memory = jax.block_until_ready(enc_fn(src))
    memory_ref = _ref_encode(src, params, nhead)
    assert jnp.allclose(memory, memory_ref, atol=2e-2, rtol=2e-2), \
        float(jnp.max(jnp.abs(memory - memory_ref)))

    dec_seq = jnp.zeros((B, max_len), jnp.int32).at[:, 0].set(2)   # <s> token
    dec_prob = jnp.zeros((B, max_len), jnp.float32).at[:, 0].set(1.0)
    cur_len = 1
    for step in range(1, max_len):
        word_prob = jax.block_until_ready(step_fn(dec_seq, step - 1, memory))
        # per-step numerics check against the pure-JAX reference
        wp_ref = _ref_step_probs(dec_seq, step - 1, memory_ref, params, nhead)
        assert jnp.allclose(word_prob, wp_ref, atol=2e-2, rtol=2e-2), \
            float(jnp.max(jnp.abs(word_prob - wp_ref)))
        preds = jnp.argmax(word_prob, axis=-1).astype(jnp.int32)
        if bool(jnp.all(preds == 3)):       # all </s> -> stop (module's break)
            break
        dec_seq = dec_seq.at[:, step].set(preds)
        dec_prob = dec_prob.at[:, step].set(jnp.max(word_prob, axis=-1))
        cur_len = step + 1

    dec_seq, dec_prob = dec_seq[:, :cur_len], dec_prob[:, :cur_len]
    jax.block_until_ready((dec_seq, dec_prob))
    assert dec_seq.shape == (B, cur_len) and dec_prob.shape == (B, cur_len)
    print("KERNEL_OK")
</pallas_src>

<mosaic_0001>
module attributes {stable_mosaic.version = 11 : i64} {
  func.func @pe_add_kernel(%arg0: i32, %arg1: memref<1x8x32xf32, #tpu.memory_space<vmem>>, %arg2: memref<8x32xf32, #tpu.memory_space<vmem>>, %arg3: memref<1x8x32xf32, #tpu.memory_space<vmem>>) attributes {dimension_semantics = [#tpu.dimension_semantics<parallel>], iteration_bounds = array<i64: 2>, scalar_prefetch = 0 : i64, scratch_operands = 0 : i64, tpu.core_type = #tpu.core_type<tc>, window_params = [{transform_indices = @transform_0, window_bounds = array<i64: 1, 8, 32>}, {pipeline_mode = #tpu.pipeline_mode<synchronous>, transform_indices = @transform_1, window_bounds = array<i64: 8, 32>}, {transform_indices = @transform_2, window_bounds = array<i64: 1, 8, 32>}]} {
    %c0 = arith.constant 0 : index
    %c0_0 = arith.constant 0 : index
    %c0_1 = arith.constant 0 : index
    %0 = vector.load %arg1[%c0, %c0_0, %c0_1] : memref<1x8x32xf32, #tpu.memory_space<vmem>>, vector<1x8x32xf32>
    %1 = vector.shape_cast %0 : vector<1x8x32xf32> to vector<8x32xf32>
    %cst = arith.constant 1.000000e+00 : f32
    %2 = vector.broadcast %cst : f32 to vector<8x32xf32>
    %3 = arith.mulf %1, %2 : vector<8x32xf32>
    %c0_2 = arith.constant 0 : index
    %c0_3 = arith.constant 0 : index
    %4 = vector.load %arg2[%c0_2, %c0_3] : memref<8x32xf32, #tpu.memory_space<vmem>>, vector<8x32xf32>
    %5 = arith.addf %3, %4 : vector<8x32xf32>
    %c0_4 = arith.constant 0 : index
    %c0_5 = arith.constant 0 : index
    %c0_6 = arith.constant 0 : index
    %6 = vector.load %arg3[%c0_4, %c0_5, %c0_6] : memref<1x8x32xf32, #tpu.memory_space<vmem>>, vector<1x8x32xf32>
    %7 = vector.shape_cast %6 : vector<1x8x32xf32> to vector<8x32xf32>
    %8 = vector.shape_cast %5 : vector<8x32xf32> to vector<1x8x32xf32>
    tpu.vector_store %arg3[%c0_4, %c0_5, %c0_6], %8 {strides = array<i32>} : memref<1x8x32xf32, #tpu.memory_space<vmem>>, vector<1x8x32xf32>,
    return
  }
  func.func @transform_0(%arg0: i32) -> (i32, i32, i32) {
    %c0_i32 = arith.constant 0 : i32
    %c0_i32_0 = arith.constant 0 : i32
    %c0_i32_1 = arith.constant 0 : i32
    return %arg0, %c0_i32, %c0_i32_0 : i32, i32, i32
  }
  func.func @transform_1(%arg0: i32) -> (i32, i32) {
    %c0_i32 = arith.constant 0 : i32
    %c0_i32_0 = arith.constant 0 : i32
    %c0_i32_1 = arith.constant 0 : i32
    return %c0_i32, %c0_i32_0 : i32, i32
  }
  func.func @transform_2(%arg0: i32) -> (i32, i32, i32) {
    %c0_i32 = arith.constant 0 : i32
    %c0_i32_0 = arith.constant 0 : i32
    %c0_i32_1 = arith.constant 0 : i32
    return %arg0, %c0_i32, %c0_i32_0 : i32, i32, i32
  }
}

module attributes {stable_mosaic.version = 11 : i64} {
  func.func @mha_addnorm_kernel(%arg0: i32, %arg1: memref<1x8x32xf32, #tpu.memory_space<vmem>>, %arg2: memref<1x8x32xf32, #tpu.memory_space<vmem>>, %arg3: memref<8x8xf32, #tpu.memory_space<vmem>>, %arg4: memref<32x32xf32, #tpu.memory_space<vmem>>, %arg5: memref<1x32xf32, #tpu.memory_space<vmem>>, %arg6: memref<32x32xf32, #tpu.memory_space<vmem>>, %arg7: memref<1x32xf32, #tpu.memory_space<vmem>>, %arg8: memref<32x32xf32, #tpu.memory_space<vmem>>, %arg9: memref<1x32xf32, #tpu.memory_space<vmem>>, %arg10: memref<32x32xf32, #tpu.memory_space<vmem>>, %arg11: memref<1x32xf32, #tpu.memory_space<vmem>>, %arg12: memref<1x32xf32, #tpu.memory_space<vmem>>, %arg13: memref<1x32xf32, #tpu.memory_space<vmem>>, %arg14: memref<1x8x32xf32, #tpu.memory_space<vmem>>) attributes {dimension_semantics = [#tpu.dimension_semantics<parallel>], iteration_bounds = array<i64: 2>, scalar_prefetch = 0 : i64, scratch_operands = 0 : i64, tpu.core_type = #tpu.core_type<tc>, window_params = [{transform_indices = @transform_0, window_bounds = array<i64: 1, 8, 32>}, {transform_indices = @transform_1, window_bounds = array<i64: 1, 8, 32>}, {pipeline_mode = #tpu.pipeline_mode<synchronous>, transform_indices = @transform_2, window_bounds = array<i64: 8, 8>}, {pipeline_mode = #tpu.pipeline_mode<synchronous>, transform_indices = @transform_3, window_bounds = array<i64: 32, 32>}, {pipeline_mode = #tpu.pipeline_mode<synchronous>, transform_indices = @transform_4, window_bounds = array<i64: 1, 32>}, {pipeline_mode = #tpu.pipeline_mode<synchronous>, transform_indices = @transform_5, window_bounds = array<i64: 32, 32>}, {pipeline_mode = #tpu.pipeline_mode<synchronous>, transform_indices = @transform_6, window_bounds = array<i64: 1, 32>}, {pipeline_mode = #tpu.pipeline_mode<synchronous>, transform_indices = @transform_7, window_bounds = array<i64: 32, 32>}, {pipeline_mode = #tpu.pipeline_mode<synchronous>, transform_indices = @transform_8, window_bounds = array<i64: 1, 32>}, {pipeline_mode = #tpu.pipeline_mode<synchronous>, transform_indices = @transform_9, window_bounds = array<i64: 32, 32>}, {pipeline_mode = #tpu.pipeline_mode<synchronous>, transform_indices = @transform_10, window_bounds = array<i64: 1, 32>}, {pipeline_mode = #tpu.pipeline_mode<synchronous>, transform_indices = @transform_11, window_bounds = array<i64: 1, 32>}, {pipeline_mode = #tpu.pipeline_mode<synchronous>, transform_indices = @transform_12, window_bounds = array<i64: 1, 32>}, {transform_indices = @transform_13, window_bounds = array<i64: 1, 8, 32>}]} {
    %c0 = arith.constant 0 : index
    %c0_0 = arith.constant 0 : index
    %c0_1 = arith.constant 0 : index
    %0 = vector.load %arg1[%c0, %c0_0, %c0_1] : memref<1x8x32xf32, #tpu.memory_space<vmem>>, vector<1x8x32xf32>
    %1 = vector.shape_cast %0 : vector<1x8x32xf32> to vector<8x32xf32>
    %c0_2 = arith.constant 0 : index
    %c0_3 = arith.constant 0 : index
    %c0_4 = arith.constant 0 : index
    %2 = vector.load %arg2[%c0_2, %c0_3, %c0_4] : memref<1x8x32xf32, #tpu.memory_space<vmem>>, vector<1x8x32xf32>
    %3 = vector.shape_cast %2 : vector<1x8x32xf32> to vector<8x32xf32>
    %c0_5 = arith.constant 0 : index
    %c0_6 = arith.constant 0 : index
    %4 = vector.load %arg4[%c0_5, %c0_6] : memref<32x32xf32, #tpu.memory_space<vmem>>, vector<32x32xf32>
    %cst = arith.constant dense<0.000000e+00> : vector<8x32xf32>
    %5 = tpu.matmul %1, %4, %cst {dimension_numbers = #tpu.dot_dimension_numbers<[1], [0], [0], [1], [0, 0, 1, 1], [], []>} : vector<8x32xf32>, vector<32x32xf32>, vector<8x32xf32> -> vector<8x32xf32>
    %c0_7 = arith.constant 0 : index
    %c0_8 = arith.constant 0 : index
    %6 = vector.load %arg5[%c0_7, %c0_8] : memref<1x32xf32, #tpu.memory_space<vmem>>, vector<1x32xf32>
    %7 = vector.broadcast %6 : vector<1x32xf32> to vector<8x32xf32>
    %8 = arith.addf %5, %7 : vector<8x32xf32>
    %c0_9 = arith.constant 0 : index
    %c0_10 = arith.constant 0 : index
    %9 = vector.load %arg6[%c0_9, %c0_10] : memref<32x32xf32, #tpu.memory_space<vmem>>, vector<32x32xf32>
    %cst_11 = arith.constant dense<0.000000e+00> : vector<8x32xf32>
    %10 = tpu.matmul %3, %9, %cst_11 {dimension_numbers = #tpu.dot_dimension_numbers<[1], [0], [0], [1], [0, 0, 1, 1], [], []>} : vector<8x32xf32>, vector<32x32xf32>, vector<8x32xf32> -> vector<8x32xf32>
    %c0_12 = arith.constant 0 : index
    %c0_13 = arith.constant 0 : index
    %11 = vector.load %arg7[%c0_12, %c0_13] : memref<1x32xf32, #tpu.memory_space<vmem>>, vector<1x32xf32>
    %12 = vector.broadcast %11 : vector<1x32xf32> to vector<8x32xf32>
    %13 = arith.addf %10, %12 : vector<8x32xf32>
    %c0_14 = arith.constant 0 : index
    %c0_15 = arith.constant 0 : index
    %14 = vector.load %arg8[%c0_14, %c0_15] : memref<32x32xf32, #tpu.memory_space<vmem>>, vector<32x32xf32>
    %cst_16 = arith.constant dense<0.000000e+00> : vector<8x32xf32>
    %15 = tpu.matmul %3, %14, %cst_16 {dimension_numbers = #tpu.dot_dimension_numbers<[1], [0], [0], [1], [0, 0, 1, 1], [], []>} : vector<8x32xf32>, vector<32x32xf32>, vector<8x32xf32> -> vector<8x32xf32>
    %c0_17 = arith.constant 0 : index
    %c0_18 = arith.constant 0 : index
    %16 = vector.load %arg9[%c0_17, %c0_18] : memref<1x32xf32, #tpu.memory_space<vmem>>, vector<1x32xf32>
    %17 = vector.broadcast %16 : vector<1x32xf32> to vector<8x32xf32>
    %18 = arith.addf %15, %17 : vector<8x32xf32>
    %c0_19 = arith.constant 0 : index
    %c0_20 = arith.constant 0 : index
    %19 = vector.load %arg3[%c0_19, %c0_20] : memref<8x8xf32, #tpu.memory_space<vmem>>, vector<8x8xf32>
    %20 = vector.extract_strided_slice %8 {offsets = [0, 0], sizes = [8, 8], strides = [1, 1]} : vector<8x32xf32> to vector<8x8xf32>
    %21 = vector.extract_strided_slice %13 {offsets = [0, 0], sizes = [8, 8], strides = [1, 1]} : vector<8x32xf32> to vector<8x8xf32>
    %22 = vector.extract_strided_slice %18 {offsets = [0, 0], sizes = [8, 8], strides = [1, 1]} : vector<8x32xf32> to vector<8x8xf32>
    %cst_21 = arith.constant dense<0.000000e+00> : vector<8x8xf32>
    %23 = tpu.matmul %20, %21, %cst_21 {dimension_numbers = #tpu.dot_dimension_numbers<[1], [1], [0], [0], [0, 0, 1, 0], [], []>} : vector<8x8xf32>, vector<8x8xf32>, vector<8x8xf32> -> vector<8x8xf32>
    %cst_22 = arith.constant 0.353553385 : f32
    %24 = vector.broadcast %cst_22 : f32 to vector<8x8xf32>
    %25 = arith.mulf %23, %24 : vector<8x8xf32>
    %26 = arith.addf %25, %19 : vector<8x8xf32>
    %cst_23 = arith.constant dense<0xFF800000> : vector<8xf32>
    %27 = vector.multi_reduction <maximumf>, %26, %cst_23 [1] : vector<8x8xf32> to vector<8xf32>
    %28 = vector.shape_cast %27 : vector<8xf32> to vector<8x1xf32>
    %29 = vector.broadcast %28 : vector<8x1xf32> to vector<8x8xf32>
    %30 = arith.subf %26, %29 : vector<8x8xf32>
    %31 = math.exp %30 : vector<8x8xf32>
    %cst_24 = arith.constant dense<0.000000e+00> : vector<8xf32>
    %32 = vector.multi_reduction <add>, %31, %cst_24 [1] : vector<8x8xf32> to vector<8xf32>
    %33 = vector.shape_cast %32 : vector<8xf32> to vector<8x1xf32>
    %34 = vector.broadcast %33 : vector<8x1xf32> to vector<8x8xf32>
    %35 = arith.divf %31, %34 : vector<8x8xf32>
    %cst_25 = arith.constant dense<0.000000e+00> : vector<8x8xf32>
    %36 = tpu.matmul %35, %22, %cst_25 {dimension_numbers = #tpu.dot_dimension_numbers<[1], [0], [0], [1], [0, 0, 1, 1], [], []>} : vector<8x8xf32>, vector<8x8xf32>, vector<8x8xf32> -> vector<8x8xf32>
    %37 = vector.extract_strided_slice %8 {offsets = [0, 8], sizes = [8, 8], strides = [1, 1]} : vector<8x32xf32> to vector<8x8xf32>
    %38 = vector.extract_strided_slice %13 {offsets = [0, 8], sizes = [8, 8], strides = [1, 1]} : vector<8x32xf32> to vector<8x8xf32>
    %39 = vector.extract_strided_slice %18 {offsets = [0, 8], sizes = [8, 8], strides = [1, 1]} : vector<8x32xf32> to vector<8x8xf32>
    %cst_26 = arith.constant dense<0.000000e+00> : vector<8x8xf32>
    %40 = tpu.matmul %37, %38, %cst_26 {dimension_numbers = #tpu.dot_dimension_numbers<[1], [1], [0], [0], [0, 0, 1, 0], [], []>} : vector<8x8xf32>, vector<8x8xf32>, vector<8x8xf32> -> vector<8x8xf32>
    %cst_27 = arith.constant 0.353553385 : f32
    %41 = vector.broadcast %cst_27 : f32 to vector<8x8xf32>
    %42 = arith.mulf %40, %41 : vector<8x8xf32>
    %43 = arith.addf %42, %19 : vector<8x8xf32>
    %cst_28 = arith.constant dense<0xFF800000> : vector<8xf32>
    %44 = vector.multi_reduction <maximumf>, %43, %cst_28 [1] : vector<8x8xf32> to vector<8xf32>
    %45 = vector.shape_cast %44 : vector<8xf32> to vector<8x1xf32>
    %46 = vector.broadcast %45 : vector<8x1xf32> to vector<8x8xf32>
    %47 = arith.subf %43, %46 : vector<8x8xf32>
    %48 = math.exp %47 : vector<8x8xf32>
    %cst_29 = arith.constant dense<0.000000e+00> : vector<8xf32>
    %49 = vector.multi_reduction <add>, %48, %cst_29 [1] : vector<8x8xf32> to vector<8xf32>
    %50 = vector.shape_cast %49 : vector<8xf32> to vector<8x1xf32>
    %51 = vector.broadcast %50 : vector<8x1xf32> to vector<8x8xf32>
    %52 = arith.divf %48, %51 : vector<8x8xf32>
    %cst_30 = arith.constant dense<0.000000e+00> : vector<8x8xf32>
    %53 = tpu.matmul %52, %39, %cst_30 {dimension_numbers = #tpu.dot_dimension_numbers<[1], [0], [0], [1], [0, 0, 1, 1], [], []>} : vector<8x8xf32>, vector<8x8xf32>, vector<8x8xf32> -> vector<8x8xf32>
    %54 = vector.extract_strided_slice %8 {offsets = [0, 16], sizes = [8, 8], strides = [1, 1]} : vector<8x32xf32> to vector<8x8xf32>
    %55 = vector.extract_strided_slice %13 {offsets = [0, 16], sizes = [8, 8], strides = [1, 1]} : vector<8x32xf32> to vector<8x8xf32>
    %56 = vector.extract_strided_slice %18 {offsets = [0, 16], sizes = [8, 8], strides = [1, 1]} : vector<8x32xf32> to vector<8x8xf32>
    %cst_31 = arith.constant dense<0.000000e+00> : vector<8x8xf32>
    %57 = tpu.matmul %54, %55, %cst_31 {dimension_numbers = #tpu.dot_dimension_numbers<[1], [1], [0], [0], [0, 0, 1, 0], [], []>} : vector<8x8xf32>, vector<8x8xf32>, vector<8x8xf32> -> vector<8x8xf32>
    %cst_32 = arith.constant 0.353553385 : f32
    %58 = vector.broadcast %cst_32 : f32 to vector<8x8xf32>
    %59 = arith.mulf %57, %58 : vector<8x8xf32>
    %60 = arith.addf %59, %19 : vector<8x8xf32>
    %cst_33 = arith.constant dense<0xFF800000> : vector<8xf32>
    %61 = vector.multi_reduction <maximumf>, %60, %cst_33 [1] : vector<8x8xf32> to vector<8xf32>
    %62 = vector.shape_cast %61 : vector<8xf32> to vector<8x1xf32>
    %63 = vector.broadcast %62 : vector<8x1xf32> to vector<8x8xf32>
    %64 = arith.subf %60, %63 : vector<8x8xf32>
    %65 = math.exp %64 : vector<8x8xf32>
    %cst_34 = arith.constant dense<0.000000e+00> : vector<8xf32>
    %66 = vector.multi_reduction <add>, %65, %cst_34 [1] : vector<8x8xf32> to vector<8xf32>
    %67 = vector.shape_cast %66 : vector<8xf32> to vector<8x1xf32>
    %68 = vector.broadcast %67 : vector<8x1xf32> to vector<8x8xf32>
    %69 = arith.divf %65, %68 : vector<8x8xf32>
    %cst_35 = arith.constant dense<0.000000e+00> : vector<8x8xf32>
    %70 = tpu.matmul %69, %56, %cst_35 {dimension_numbers = #tpu.dot_dimension_numbers<[1], [0], [0], [1], [0, 0, 1, 1], [], []>} : vector<8x8xf32>, vector<8x8xf32>, vector<8x8xf32> -> vector<8x8xf32>
    %71 = vector.extract_strided_slice %8 {offsets = [0, 24], sizes = [8, 8], strides = [1, 1]} : vector<8x32xf32> to vector<8x8xf32>
    %72 = vector.extract_strided_slice %13 {offsets = [0, 24], sizes = [8, 8], strides = [1, 1]} : vector<8x32xf32> to vector<8x8xf32>
    %73 = vector.extract_strided_slice %18 {offsets = [0, 24], sizes = [8, 8], strides = [1, 1]} : vector<8x32xf32> to vector<8x8xf32>
    %cst_36 = arith.constant dense<0.000000e+00> : vector<8x8xf32>
    %74 = tpu.matmul %71, %72, %cst_36 {dimension_numbers = #tpu.dot_dimension_numbers<[1], [1], [0], [0], [0, 0, 1, 0], [], []>} : vector<8x8xf32>, vector<8x8xf32>, vector<8x8xf32> -> vector<8x8xf32>
    %cst_37 = arith.constant 0.353553385 : f32
    %75 = vector.broadcast %cst_37 : f32 to vector<8x8xf32>
    %76 = arith.mulf %74, %75 : vector<8x8xf32>
    %77 = arith.addf %76, %19 : vector<8x8xf32>
    %cst_38 = arith.constant dense<0xFF800000> : vector<8xf32>
    %78 = vector.multi_reduction <maximumf>, %77, %cst_38 [1] : vector<8x8xf32> to vector<8xf32>
    %79 = vector.shape_cast %78 : vector<8xf32> to vector<8x1xf32>
    %80 = vector.broadcast %79 : vector<8x1xf32> to vector<8x8xf32>
    %81 = arith.subf %77, %80 : vector<8x8xf32>
    %82 = math.exp %81 : vector<8x8xf32>
    %cst_39 = arith.constant dense<0.000000e+00> : vector<8xf32>
    %83 = vector.multi_reduction <add>, %82, %cst_39 [1] : vector<8x8xf32> to vector<8xf32>
    %84 = vector.shape_cast %83 : vector<8xf32> to vector<8x1xf32>
    %85 = vector.broadcast %84 : vector<8x1xf32> to vector<8x8xf32>
    %86 = arith.divf %82, %85 : vector<8x8xf32>
    %cst_40 = arith.constant dense<0.000000e+00> : vector<8x8xf32>
    %87 = tpu.matmul %86, %73, %cst_40 {dimension_numbers = #tpu.dot_dimension_numbers<[1], [0], [0], [1], [0, 0, 1, 1], [], []>} : vector<8x8xf32>, vector<8x8xf32>, vector<8x8xf32> -> vector<8x8xf32>
    %88 = tpu.concatenate %36, %53, %70, %87 in 1 : vector<8x8xf32>, vector<8x8xf32>, vector<8x8xf32>, vector<8x8xf32> -> vector<8x32xf32>
    %c0_41 = arith.constant 0 : index
    %c0_42 = arith.constant 0 : index
    %89 = vector.load %arg10[%c0_41, %c0_42] : memref<32x32xf32, #tpu.memory_space<vmem>>, vector<32x32xf32>
    %cst_43 = arith.constant dense<0.000000e+00> : vector<8x32xf32>
    %90 = tpu.matmul %88, %89, %cst_43 {dimension_numbers = #tpu.dot_dimension_numbers<[1], [0], [0], [1], [0, 0, 1, 1], [], []>} : vector<8x32xf32>, vector<32x32xf32>, vector<8x32xf32> -> vector<8x32xf32>
    %c0_44 = arith.constant 0 : index
    %c0_45 = arith.constant 0 : index
    %91 = vector.load %arg11[%c0_44, %c0_45] : memref<1x32xf32, #tpu.memory_space<vmem>>, vector<1x32xf32>
    %92 = vector.broadcast %91 : vector<1x32xf32> to vector<8x32xf32>
    %93 = arith.addf %90, %92 : vector<8x32xf32>
    %94 = arith.addf %1, %93 : vector<8x32xf32>
    %cst_46 = arith.constant dense<0.000000e+00> : vector<8xf32>
    %95 = vector.multi_reduction <add>, %94, %cst_46 [1] : vector<8x32xf32> to vector<8xf32>
    %96 = vector.shape_cast %95 : vector<8xf32> to vector<8x1xf32>
    %cst_47 = arith.constant 3.200000e+01 : f32
    %97 = vector.broadcast %cst_47 : f32 to vector<8x1xf32>
    %98 = arith.divf %96, %97 : vector<8x1xf32>
    %99 = vector.broadcast %98 : vector<8x1xf32> to vector<8x32xf32>
    %100 = arith.subf %94, %99 : vector<8x32xf32>
    %101 = arith.mulf %100, %100 : vector<8x32xf32>
    %cst_48 = arith.constant dense<0.000000e+00> : vector<8xf32>
    %102 = vector.multi_reduction <add>, %101, %cst_48 [1] : vector<8x32xf32> to vector<8xf32>
    %103 = vector.shape_cast %102 : vector<8xf32> to vector<8x1xf32>
    %cst_49 = arith.constant 3.200000e+01 : f32
    %104 = vector.broadcast %cst_49 : f32 to vector<8x1xf32>
    %105 = arith.divf %103, %104 : vector<8x1xf32>
    %106 = vector.broadcast %98 : vector<8x1xf32> to vector<8x32xf32>
    %107 = arith.subf %94, %106 : vector<8x32xf32>
    %cst_50 = arith.constant 9.99999974E-6 : f32
    %108 = vector.broadcast %cst_50 : f32 to vector<8x1xf32>
    %109 = arith.addf %105, %108 : vector<8x1xf32>
    %110 = math.rsqrt %109 : vector<8x1xf32>
    %111 = vector.broadcast %110 : vector<8x1xf32> to vector<8x32xf32>
    %112 = arith.mulf %107, %111 : vector<8x32xf32>
    %c0_51 = arith.constant 0 : index
    %c0_52 = arith.constant 0 : index
    %113 = vector.load %arg12[%c0_51, %c0_52] : memref<1x32xf32, #tpu.memory_space<vmem>>, vector<1x32xf32>
    %114 = vector.broadcast %113 : vector<1x32xf32> to vector<8x32xf32>
    %115 = arith.mulf %112, %114 : vector<8x32xf32>
    %c0_53 = arith.constant 0 : index
    %c0_54 = arith.constant 0 : index
    %116 = vector.load %arg13[%c0_53, %c0_54] : memref<1x32xf32, #tpu.memory_space<vmem>>, vector<1x32xf32>
    %117 = vector.broadcast %116 : vector<1x32xf32> to vector<8x32xf32>
    %118 = arith.addf %115, %117 : vector<8x32xf32>
    %c0_55 = arith.constant 0 : index
    %c0_56 = arith.constant 0 : index
    %c0_57 = arith.constant 0 : index
    %119 = vector.load %arg14[%c0_55, %c0_56, %c0_57] : memref<1x8x32xf32, #tpu.memory_space<vmem>>, vector<1x8x32xf32>
    %120 = vector.shape_cast %119 : vector<1x8x32xf32> to vector<8x32xf32>
    %121 = vector.shape_cast %118 : vector<8x32xf32> to vector<1x8x32xf32>
    tpu.vector_store %arg14[%c0_55, %c0_56, %c0_57], %121 {strides = array<i32>} : memref<1x8x32xf32, #tpu.memory_space<vmem>>, vector<1x8x32xf32>,
    return
  }
  func.func @transform_0(%arg0: i32) -> (i32, i32, i32) {
    %c0_i32 = arith.constant 0 : i32
    %c0_i32_0 = arith.constant 0 : i32
    %c0_i32_1 = arith.constant 0 : i32
    return %arg0, %c0_i32, %c0_i32_0 : i32, i32, i32
  }
  func.func @transform_1(%arg0: i32) -> (i32, i32, i32) {
    %c0_i32 = arith.constant 0 : i32
    %c0_i32_0 = arith.constant 0 : i32
    %c0_i32_1 = arith.constant 0 : i32
    return %arg0, %c0_i32, %c0_i32_0 : i32, i32, i32
  }
  func.func @transform_2(%arg0: i32) -> (i32, i32) {
    %c0_i32 = arith.constant 0 : i32
    %c0_i32_0 = arith.constant 0 : i32
    %c0_i32_1 = arith.constant 0 : i32
    return %c0_i32, %c0_i32_0 : i32, i32
  }
  func.func @transform_3(%arg0: i32) -> (i32, i32) {
    %c0_i32 = arith.constant 0 : i32
    %c0_i32_0 = arith.constant 0 : i32
    %c0_i32_1 = arith.constant 0 : i32
    return %c0_i32, %c0_i32_0 : i32, i32
  }
  func.func @transform_4(%arg0: i32) -> (i32, i32) {
    %c0_i32 = arith.constant 0 : i32
    %c0_i32_0 = arith.constant 0 : i32
    %c0_i32_1 = arith.constant 0 : i32
    return %c0_i32, %c0_i32_0 : i32, i32
  }
  func.func @transform_5(%arg0: i32) -> (i32, i32) {
    %c0_i32 = arith.constant 0 : i32
    %c0_i32_0 = arith.constant 0 : i32
    %c0_i32_1 = arith.constant 0 : i32
    return %c0_i32, %c0_i32_0 : i32, i32
  }
  func.func @transform_6(%arg0: i32) -> (i32, i32) {
    %c0_i32 = arith.constant 0 : i32
    %c0_i32_0 = arith.constant 0 : i32
    %c0_i32_1 = arith.constant 0 : i32
    return %c0_i32, %c0_i32_0 : i32, i32
  }
  func.func @transform_7(%arg0: i32) -> (i32, i32) {
    %c0_i32 = arith.constant 0 : i32
    %c0_i32_0 = arith.constant 0 : i32
    %c0_i32_1 = arith.constant 0 : i32
    return %c0_i32, %c0_i32_0 : i32, i32
  }
  func.func @transform_8(%arg0: i32) -> (i32, i32) {
    %c0_i32 = arith.constant 0 : i32
    %c0_i32_0 = arith.constant 0 : i32
    %c0_i32_1 = arith.constant 0 : i32
    return %c0_i32, %c0_i32_0 : i32, i32
  }
  func.func @transform_9(%arg0: i32) -> (i32, i32) {
    %c0_i32 = arith.constant 0 : i32
    %c0_i32_0 = arith.constant 0 : i32
    %c0_i32_1 = arith.constant 0 : i32
    return %c0_i32, %c0_i32_0 : i32, i32
  }
  func.func @transform_10(%arg0: i32) -> (i32, i32) {
    %c0_i32 = arith.constant 0 : i32
    %c0_i32_0 = arith.constant 0 : i32
    %c0_i32_1 = arith.constant 0 : i32
    return %c0_i32, %c0_i32_0 : i32, i32
  }
  func.func @transform_11(%arg0: i32) -> (i32, i32) {
    %c0_i32 = arith.constant 0 : i32
    %c0_i32_0 = arith.constant 0 : i32
    %c0_i32_1 = arith.constant 0 : i32
    return %c0_i32, %c0_i32_0 : i32, i32
  }
  func.func @transform_12(%arg0: i32) -> (i32, i32) {
    %c0_i32 = arith.constant 0 : i32
    %c0_i32_0 = arith.constant 0 : i32
    %c0_i32_1 = arith.constant 0 : i32
    return %c0_i32, %c0_i32_0 : i32, i32
  }
  func.func @transform_13(%arg0: i32) -> (i32, i32, i32) {
    %c0_i32 = arith.constant 0 : i32
    %c0_i32_0 = arith.constant 0 : i32
    %c0_i32_1 = arith.constant 0 : i32
    return %arg0, %c0_i32, %c0_i32_0 : i32, i32, i32
  }
}

module attributes {stable_mosaic.version = 11 : i64} {
  func.func @ffn_addnorm_kernel(%arg0: i32, %arg1: memref<1x8x32xf32, #tpu.memory_space<vmem>>, %arg2: memref<32x64xf32, #tpu.memory_space<vmem>>, %arg3: memref<1x64xf32, #tpu.memory_space<vmem>>, %arg4: memref<64x32xf32, #tpu.memory_space<vmem>>, %arg5: memref<1x32xf32, #tpu.memory_space<vmem>>, %arg6: memref<1x32xf32, #tpu.memory_space<vmem>>, %arg7: memref<1x32xf32, #tpu.memory_space<vmem>>, %arg8: memref<1x8x32xf32, #tpu.memory_space<vmem>>) attributes {dimension_semantics = [#tpu.dimension_semantics<parallel>], iteration_bounds = array<i64: 2>, scalar_prefetch = 0 : i64, scratch_operands = 0 : i64, tpu.core_type = #tpu.core_type<tc>, window_params = [{transform_indices = @transform_0, window_bounds = array<i64: 1, 8, 32>}, {pipeline_mode = #tpu.pipeline_mode<synchronous>, transform_indices = @transform_1, window_bounds = array<i64: 32, 64>}, {pipeline_mode = #tpu.pipeline_mode<synchronous>, transform_indices = @transform_2, window_bounds = array<i64: 1, 64>}, {pipeline_mode = #tpu.pipeline_mode<synchronous>, transform_indices = @transform_3, window_bounds = array<i64: 64, 32>}, {pipeline_mode = #tpu.pipeline_mode<synchronous>, transform_indices = @transform_4, window_bounds = array<i64: 1, 32>}, {pipeline_mode = #tpu.pipeline_mode<synchronous>, transform_indices = @transform_5, window_bounds = array<i64: 1, 32>}, {pipeline_mode = #tpu.pipeline_mode<synchronous>, transform_indices = @transform_6, window_bounds = array<i64: 1, 32>}, {transform_indices = @transform_7, window_bounds = array<i64: 1, 8, 32>}]} {
    %c0 = arith.constant 0 : index
    %c0_0 = arith.constant 0 : index
    %c0_1 = arith.constant 0 : index
    %0 = vector.load %arg1[%c0, %c0_0, %c0_1] : memref<1x8x32xf32, #tpu.memory_space<vmem>>, vector<1x8x32xf32>
    %1 = vector.shape_cast %0 : vector<1x8x32xf32> to vector<8x32xf32>
    %c0_2 = arith.constant 0 : index
    %c0_3 = arith.constant 0 : index
    %2 = vector.load %arg2[%c0_2, %c0_3] : memref<32x64xf32, #tpu.memory_space<vmem>>, vector<32x64xf32>
    %cst = arith.constant dense<0.000000e+00> : vector<8x64xf32>
    %3 = tpu.matmul %1, %2, %cst {dimension_numbers = #tpu.dot_dimension_numbers<[1], [0], [0], [1], [0, 0, 1, 1], [], []>} : vector<8x32xf32>, vector<32x64xf32>, vector<8x64xf32> -> vector<8x64xf32>
    %c0_4 = arith.constant 0 : index
    %c0_5 = arith.constant 0 : index
    %4 = vector.load %arg3[%c0_4, %c0_5] : memref<1x64xf32, #tpu.memory_space<vmem>>, vector<1x64xf32>
    %5 = vector.broadcast %4 : vector<1x64xf32> to vector<8x64xf32>
    %6 = arith.addf %3, %5 : vector<8x64xf32>
    %cst_6 = arith.constant 0.000000e+00 : f32
    %7 = vector.broadcast %cst_6 : f32 to vector<8x64xf32>
    %8 = arith.maximumf %6, %7 : vector<8x64xf32>
    %c0_7 = arith.constant 0 : index
    %c0_8 = arith.constant 0 : index
    %9 = vector.load %arg4[%c0_7, %c0_8] : memref<64x32xf32, #tpu.memory_space<vmem>>, vector<64x32xf32>
    %cst_9 = arith.constant dense<0.000000e+00> : vector<8x32xf32>
    %10 = tpu.matmul %8, %9, %cst_9 {dimension_numbers = #tpu.dot_dimension_numbers<[1], [0], [0], [1], [0, 0, 1, 1], [], []>} : vector<8x64xf32>, vector<64x32xf32>, vector<8x32xf32> -> vector<8x32xf32>
    %c0_10 = arith.constant 0 : index
    %c0_11 = arith.constant 0 : index
    %11 = vector.load %arg5[%c0_10, %c0_11] : memref<1x32xf32, #tpu.memory_space<vmem>>, vector<1x32xf32>
    %12 = vector.broadcast %11 : vector<1x32xf32> to vector<8x32xf32>
    %13 = arith.addf %10, %12 : vector<8x32xf32>
    %14 = arith.addf %1, %13 : vector<8x32xf32>
    %cst_12 = arith.constant dense<0.000000e+00> : vector<8xf32>
    %15 = vector.multi_reduction <add>, %14, %cst_12 [1] : vector<8x32xf32> to vector<8xf32>
    %16 = vector.shape_cast %15 : vector<8xf32> to vector<8x1xf32>
    %cst_13 = arith.constant 3.200000e+01 : f32
    %17 = vector.broadcast %cst_13 : f32 to vector<8x1xf32>
    %18 = arith.divf %16, %17 : vector<8x1xf32>
    %19 = vector.broadcast %18 : vector<8x1xf32> to vector<8x32xf32>
    %20 = arith.subf %14, %19 : vector<8x32xf32>
    %21 = arith.mulf %20, %20 : vector<8x32xf32>
    %cst_14 = arith.constant dense<0.000000e+00> : vector<8xf32>
    %22 = vector.multi_reduction <add>, %21, %cst_14 [1] : vector<8x32xf32> to vector<8xf32>
    %23 = vector.shape_cast %22 : vector<8xf32> to vector<8x1xf32>
    %cst_15 = arith.constant 3.200000e+01 : f32
    %24 = vector.broadcast %cst_15 : f32 to vector<8x1xf32>
    %25 = arith.divf %23, %24 : vector<8x1xf32>
    %26 = vector.broadcast %18 : vector<8x1xf32> to vector<8x32xf32>
    %27 = arith.subf %14, %26 : vector<8x32xf32>
    %cst_16 = arith.constant 9.99999974E-6 : f32
    %28 = vector.broadcast %cst_16 : f32 to vector<8x1xf32>
    %29 = arith.addf %25, %28 : vector<8x1xf32>
    %30 = math.rsqrt %29 : vector<8x1xf32>
    %31 = vector.broadcast %30 : vector<8x1xf32> to vector<8x32xf32>
    %32 = arith.mulf %27, %31 : vector<8x32xf32>
    %c0_17 = arith.constant 0 : index
    %c0_18 = arith.constant 0 : index
    %33 = vector.load %arg6[%c0_17, %c0_18] : memref<1x32xf32, #tpu.memory_space<vmem>>, vector<1x32xf32>
    %34 = vector.broadcast %33 : vector<1x32xf32> to vector<8x32xf32>
    %35 = arith.mulf %32, %34 : vector<8x32xf32>
    %c0_19 = arith.constant 0 : index
    %c0_20 = arith.constant 0 : index
    %36 = vector.load %arg7[%c0_19, %c0_20] : memref<1x32xf32, #tpu.memory_space<vmem>>, vector<1x32xf32>
    %37 = vector.broadcast %36 : vector<1x32xf32> to vector<8x32xf32>
    %38 = arith.addf %35, %37 : vector<8x32xf32>
    %c0_21 = arith.constant 0 : index
    %c0_22 = arith.constant 0 : index
    %c0_23 = arith.constant 0 : index
    %39 = vector.load %arg8[%c0_21, %c0_22, %c0_23] : memref<1x8x32xf32, #tpu.memory_space<vmem>>, vector<1x8x32xf32>
    %40 = vector.shape_cast %39 : vector<1x8x32xf32> to vector<8x32xf32>
    %41 = vector.shape_cast %38 : vector<8x32xf32> to vector<1x8x32xf32>
    tpu.vector_store %arg8[%c0_21, %c0_22, %c0_23], %41 {strides = array<i32>} : memref<1x8x32xf32, #tpu.memory_space<vmem>>, vector<1x8x32xf32>,
    return
  }
  func.func @transform_0(%arg0: i32) -> (i32, i32, i32) {
    %c0_i32 = arith.constant 0 : i32
    %c0_i32_0 = arith.constant 0 : i32
    %c0_i32_1 = arith.constant 0 : i32
    return %arg0, %c0_i32, %c0_i32_0 : i32, i32, i32
  }
  func.func @transform_1(%arg0: i32) -> (i32, i32) {
    %c0_i32 = arith.constant 0 : i32
    %c0_i32_0 = arith.constant 0 : i32
    %c0_i32_1 = arith.constant 0 : i32
    return %c0_i32, %c0_i32_0 : i32, i32
  }
  func.func @transform_2(%arg0: i32) -> (i32, i32) {
    %c0_i32 = arith.constant 0 : i32
    %c0_i32_0 = arith.constant 0 : i32
    %c0_i32_1 = arith.constant 0 : i32
    return %c0_i32, %c0_i32_0 : i32, i32
  }
  func.func @transform_3(%arg0: i32) -> (i32, i32) {
    %c0_i32 = arith.constant 0 : i32
    %c0_i32_0 = arith.constant 0 : i32
    %c0_i32_1 = arith.constant 0 : i32
    return %c0_i32, %c0_i32_0 : i32, i32
  }
  func.func @transform_4(%arg0: i32) -> (i32, i32) {
    %c0_i32 = arith.constant 0 : i32
    %c0_i32_0 = arith.constant 0 : i32
    %c0_i32_1 = arith.constant 0 : i32
    return %c0_i32, %c0_i32_0 : i32, i32
  }
  func.func @transform_5(%arg0: i32) -> (i32, i32) {
    %c0_i32 = arith.constant 0 : i32
    %c0_i32_0 = arith.constant 0 : i32
    %c0_i32_1 = arith.constant 0 : i32
    return %c0_i32, %c0_i32_0 : i32, i32
  }
  func.func @transform_6(%arg0: i32) -> (i32, i32) {
    %c0_i32 = arith.constant 0 : i32
    %c0_i32_0 = arith.constant 0 : i32
    %c0_i32_1 = arith.constant 0 : i32
    return %c0_i32, %c0_i32_0 : i32, i32
  }
  func.func @transform_7(%arg0: i32) -> (i32, i32, i32) {
    %c0_i32 = arith.constant 0 : i32
    %c0_i32_0 = arith.constant 0 : i32
    %c0_i32_1 = arith.constant 0 : i32
    return %arg0, %c0_i32, %c0_i32_0 : i32, i32, i32
  }
}

</mosaic_0001>

<llo_original>
// kernel: _lambda_.3
$region0: #{_lambda_.3}
  #allocation0 [shape = 'u32[]', space=smem, size = 0x4, offset = 0x4, fixed_abs, tag = 'smem constant byte address 0x4 - core index']
  #allocation1 [shape = 'u32[144,128]{1,0:T(1,128)}', space=vmem, size = 0x12000, scoped, tag = 'internal scratch']
  %s0 = inlined_call_operand.hbm [shape: f32[2,8,32], index: 0, kind: input, shape index: {}]
  %s1 = inlined_call_operand.vmem [shape: f32[8,32], index: 1, kind: input, shape index: {}]
  %s2 = inlined_call_operand.vmem [shape: f32[2,8,32], index: 2, kind: output, shape index: {}]
  %s3 = sld [smem:[#allocation0]]
  $region45: #{_lambda_.3} parent=0
    _
  %s5 = ssub.s32 1, %s3
  %s6 = scalar_select 0, %s5, %s3
  $region1: #{_lambda_.3} parent=0
    #allocation2 [shape = 'u8[8192]{0}', space=vmem, size = 0x2000, scoped, tag = 'input window, operand 0']
    #allocation3 [shape = 's32[2]{0}', space=sflag, size = 0x8, scoped, tag = 'scoped memory for _lambda_.3']
    %7 = vsyncpa [#allocation3], 0
    %s8 = scalar_lea.sflag [#allocation3], 1
    %9 = vsyncpa %s8, 0
    loop: start=0, step=1, limit=4
    $region2: #{_lambda_.3} parent=1 // loop_pre_header
      _
    $region3: #{_lambda_.3} parent=1 // loop_header
      %s11 = sphi 0, %s15
      %p12 = scmp.ge.s32.totalorder %s11, 4
      %s21 = sphi 0, %s23
      %s24 = sphi 0, %s21
      %s25 = sphi 0, %s24
      %s41 = sphi 0, %s25
      %s45 = sphi 0, %s45
      %s47 = sphi 0, %s45
      %s48 = sphi 0, %s47
      %s62 = sphi 0, %s48
      %s68 = sphi 0, %s70
      %s71 = sphi 0, %s68
      %s72 = sphi 0, %s71
      %s88 = sphi 0, %s72
    $region4: #{_lambda_.3} parent=1 // loop_header_branch
      %14 = sbr.rel (%p12) target = $region8
    $region5: #{_lambda_.3} parent=1 // loop_body
      %s16 = ssub.s32 %s11, 1
      %s17 = ssub.s32 %s11, 2
      %s18 = sadd.s32 %s11, 1
      %s19 = ssub.s32 %s11, %s18
      %p20 = scmp.eq.s32.totalorder %s19, 0
      %s22 = sadd.s32 %s21, 1
      %s23 = scalar_select %p20, %s21, %s22
      %p26 = pneg %p20
      %p27 = scmp.eq.s32.totalorder %s11, 1
      %p28 = por %p26, %p27
      %p29 = scmp.ne.s32.totalorder %s21, %s24
      %p30 = scmp.eq.s32.totalorder %s11, 0
      %p31 = por %p29, %p30
      %p32 = scmp.ne.s32.totalorder %s21, %s24
      %p33 = scmp.eq.s32.totalorder %s16, 1
      %p34 = por %p32, %p33
      %p35 = scmp.ne.s32.totalorder %s24, %s25
      %p36 = scmp.eq.s32.totalorder %s16, 0
      %p37 = por %p35, %p36
      %p38 = scmp.ne.s32.totalorder %s24, %s25
      %p39 = scmp.eq.s32.totalorder %s17, 1
      %p40 = por %p38, %p39
      %p42 = scmp.ne.s32.totalorder %s25, %s41
      %p43 = scmp.eq.s32.totalorder %s17, 0
      %p44 = por %p42, %p43
      %s46 = sadd.s32 %s45, 1
      %p49 = scmp.eq.s32.totalorder %s11, 1
      %p50 = scmp.ne.s32.totalorder %s45, %s47
      %p51 = scmp.eq.s32.totalorder %s11, 0
      %p52 = por %p50, %p51
      %p53 = scmp.ne.s32.totalorder %s45, %s47
      %p54 = scmp.eq.s32.totalorder %s16, 1
      %p55 = por %p53, %p54
      %p56 = scmp.ne.s32.totalorder %s47, %s48
      %p57 = scmp.eq.s32.totalorder %s16, 0
      %p58 = por %p56, %p57
      %p59 = scmp.ne.s32.totalorder %s47, %s48
      %p60 = scmp.eq.s32.totalorder %s17, 1
      %p61 = por %p59, %p60
      %p63 = scmp.ne.s32.totalorder %s48, %s62
      %p64 = scmp.eq.s32.totalorder %s17, 0
      %p65 = por %p63, %p64
      %s66 = ssub.s32 %s11, %s18
      %p67 = scmp.eq.s32.totalorder %s66, 0
      %s69 = sadd.s32 %s68, 1
      %s70 = scalar_select %p67, %s68, %s69
      %p73 = pneg %p67
      %p74 = scmp.eq.s32.totalorder %s11, 1
      %p75 = por %p73, %p74
      %p76 = scmp.ne.s32.totalorder %s68, %s71
      %p77 = scmp.eq.s32.totalorder %s11, 0
      %p78 = por %p76, %p77
      %p79 = scmp.ne.s32.totalorder %s68, %s71
      %p80 = scmp.eq.s32.totalorder %s16, 1
      %p81 = por %p79, %p80
      %p82 = scmp.ne.s32.totalorder %s71, %s72
      %p83 = scmp.eq.s32.totalorder %s16, 0
      %p84 = por %p82, %p83
      %p85 = scmp.ne.s32.totalorder %s71, %s72
      %p86 = scmp.eq.s32.totalorder %s17, 1
      %p87 = por %p85, %p86
      %p89 = scmp.ne.s32.totalorder %s72, %s88
      %p90 = scmp.eq.s32.totalorder %s17, 0
      %p91 = por %p89, %p90
      %p92 = scmp.le.s32.totalorder 1, %s11
      %p93 = scmp.lt.s32.totalorder %s11, 3
      %p94 = pnand %p92, %p93
      %p95 = pneg %p94
      // Predicated region
      $region9: #{_lambda_.3} parent=5 // pred_check
        _
      $region10: #{_lambda_.3} parent=5 // pred_check_branch
        %97 = sbr.rel (%p94) target = $region12
      $region11: #{_lambda_.3} parent=5 // pred_region
        %s98 = ssub.s32 %s11, 1
        // Predicated region
        $region13: #{_lambda_.3} parent=11 // pred_check
          %p99 = pneg %p58
        $region14: #{_lambda_.3} parent=11 // pred_check_branch
          %101 = sbr.rel (%p99) target = $region16
        $region15: #{_lambda_.3} parent=11 // pred_region
          _
        $region16: #{_lambda_.3} parent=11 // pred_fallthru
          _
      $region12: #{_lambda_.3} parent=5 // pred_fallthru
        _
      %p102 = scmp.lt.s32.totalorder %s11, 2
      // Predicated region
      $region17: #{_lambda_.3} parent=5 // pred_check
        %p103 = pneg %p102
      $region18: #{_lambda_.3} parent=5 // pred_check_branch
        %105 = sbr.rel (%p103) target = $region20
      $region19: #{_lambda_.3} parent=5 // pred_region
        // Predicated region
        $region21: #{_lambda_.3} parent=19 // pred_check
          %p106 = pneg %p31
        $region22: #{_lambda_.3} parent=19 // pred_check_branch
          %108 = sbr.rel (%p106) target = $region24
        $region23: #{_lambda_.3} parent=19 // pred_region
          %s109 = sand.u32 %s21, 1
          %s110 = scalar_lea.sflag [#allocation3], %s109
          %s111 = sand.u32 %s21, 1
          %s112 = smul.addr %s111, 8
          %s113 = scalar_lea.vmem [#allocation2], %s112
          %s115 = ssub.s32 128, 128
          %116 = vsyncadd %s110, %s115
          %s117 = smul.addr %s11, 128
          %s118 = scalar_lea.hbm %s0, %s117
          %s120 = sshll.u32 %s113, 4
          %s121 = int_to_ptr.vmem [resolvable:$true] %s120
          %123 = dma.hbm_to_vmem [thread:$0]  %s118, 128, %s121, %s110
        $region24: #{_lambda_.3} parent=19 // pred_fallthru
          _
      $region20: #{_lambda_.3} parent=5 // pred_fallthru
        _
      %p124 = scmp.le.s32.totalorder 1, %s11
      %p125 = scmp.lt.s32.totalorder %s11, 3
      %p126 = pnand %p124, %p125
      %p127 = pneg %p126
      // Predicated region
      $region25: #{_lambda_.3} parent=5 // pred_check
        _
      $region26: #{_lambda_.3} parent=5 // pred_check_branch
        %129 = sbr.rel (%p126) target = $region28
      $region27: #{_lambda_.3} parent=5 // pred_region
        %s130 = ssub.s32 %s11, 1
        %s131 = sand.u32 %s24, 1
        %s132 = scalar_lea.sflag [#allocation3], %s131
        %s133 = sand.u32 %s24, 1
        %s134 = smul.addr %s133, 8
        %s135 = scalar_lea.vmem [#allocation2], %s134
        // Predicated region
        $region29: #{_lambda_.3} parent=27 // pred_check
          %p136 = pneg %p37
        $region30: #{_lambda_.3} parent=27 // pred_check_branch
          %138 = sbr.rel (%p136) target = $region32
        $region31: #{_lambda_.3} parent=27 // pred_region
          %139 = dma.done %s132, 128
        $region32: #{_lambda_.3} parent=27 // pred_fallthru
          _
        %s140 = sand.u32 %s24, 1
        %s141 = scalar_lea.sflag [#allocation3], %s140
        %s142 = sand.u32 %s24, 1
        %s143 = smul.addr %s142, 8
        %s144 = scalar_lea.vmem [#allocation2], %s143
        %p145 = pneg %p37
        %p146 = pneg %p34
        %p147 = pneg %p58
        %p148 = pneg %p55
        %p149 = pneg %p84
        %p150 = pneg %p81
        %p151 = scmp.lt.s32.totalorder %s16, 1
        %s152 = scalar_select %p151, %s16, 1
        %s153 = smul.addr %s152, 8
        %s154 = scalar_lea.vmem %s2, %s153
        %p155 = scmp.lt.s32.totalorder %s16, 1
        %s156 = scalar_select %p155, %s16, 1
        %s157 = smul.addr %s156, 8
        %s158 = scalar_lea.vmem %s2, %s157
        %v159 = vld [vmem:[%s135] sm:$0xff]
        %v160 = vld [vmem:[%s1] sm:$0xff]
        %v161 = vadd.f32 %v159, %v160
        %vm162 = vcmask 261120
        %163 = vst.msk [vmem:[%s158] sm:$0xff] %vm162, %v161
        %p164 = scmp.lt.s32.totalorder %s16, 1
        %s165 = scalar_select %p164, %s16, 1
        %s166 = smul.addr %s165, 8
        %s167 = scalar_lea.vmem %s2, %s166
        // Predicated region
        $region33: #{_lambda_.3} parent=27 // pred_check
          %p168 = pneg %p81
        $region34: #{_lambda_.3} parent=27 // pred_check_branch
          %170 = sbr.rel (%p168) target = $region36
        $region35: #{_lambda_.3} parent=27 // pred_region
          _
        $region36: #{_lambda_.3} parent=27 // pred_fallthru
          _
      $region28: #{_lambda_.3} parent=5 // pred_fallthru
        _
      %p171 = scmp.le.s32.totalorder 2, %s11
      // Predicated region
      $region37: #{_lambda_.3} parent=5 // pred_check
        %p172 = pneg %p171
      $region38: #{_lambda_.3} parent=5 // pred_check_branch
        %174 = sbr.rel (%p172) target = $region40
      $region39: #{_lambda_.3} parent=5 // pred_region
        %s175 = ssub.s32 %s11, 2
        // Predicated region
        $region41: #{_lambda_.3} parent=39 // pred_check
          %p176 = pneg %p87
        $region42: #{_lambda_.3} parent=39 // pred_check_branch
          %178 = sbr.rel (%p176) target = $region44
        $region43: #{_lambda_.3} parent=39 // pred_region
          %p179 = scmp.lt.s32.totalorder %s17, 1
          %s180 = scalar_select %p179, %s17, 1
          %s181 = smul.addr %s180, 8
          %s182 = scalar_lea.vmem %s2, %s181
        $region44: #{_lambda_.3} parent=39 // pred_fallthru
          _
      $region40: #{_lambda_.3} parent=5 // pred_fallthru
        _
    $region6: #{_lambda_.3} parent=1 // loop_footer
      %s15 = sadd.s32 1, %s11
    $region7: #{_lambda_.3} parent=1 // loop_footer_branch
      %10 = sbr.rel target = $region3
    $region8: #{_lambda_.3} parent=1 // loop_exit
      _
    %183 = vsyncpa [#allocation3], 1
    %s184 = scalar_lea.sflag [#allocation3], 1
    %185 = vsyncpa %s184, 1

// kernel: _lambda_.5
$region0: #{_lambda_.5}
  #allocation0 [shape = 'u32[]', space=smem, size = 0x4, offset = 0x4, fixed_abs, tag = 'smem constant byte address 0x4 - core index']
  #allocation1 [shape = 'u32[144,128]{1,0:T(1,128)}', space=vmem, size = 0x12000, scoped, tag = 'internal scratch']
  %s0 = inlined_call_operand.vmem [shape: f32[2,8,32], index: 0, kind: input, shape index: {}]
  %s1 = inlined_call_operand.vmem [shape: f32[32,64], index: 1, kind: input, shape index: {}]
  %s2 = inlined_call_operand.vmem [shape: f32[1,64], index: 2, kind: input, shape index: {}]
  %s3 = inlined_call_operand.vmem [shape: f32[64,32], index: 3, kind: input, shape index: {}]
  %s4 = inlined_call_operand.vmem [shape: f32[1,32], index: 4, kind: input, shape index: {}, may-alias: {4,6}]
  %s5 = inlined_call_operand.vmem [shape: f32[1,32], index: 5, kind: input, shape index: {}]
  %s6 = inlined_call_operand.vmem [shape: f32[1,32], index: 6, kind: input, shape index: {}, may-alias: {4,6}]
  %s7 = inlined_call_operand.hbm [shape: f32[2,8,32], index: 7, kind: output, shape index: {}]
  %s8 = sld [smem:[#allocation0]]
  $region61: #{_lambda_.5} parent=0
    _
  %s10 = ssub.s32 1, %s8
  %s11 = scalar_select 0, %s10, %s8
  $region1: #{_lambda_.5} parent=0
    #allocation2 [shape = 'u8[8192]{0}', space=vmem, size = 0x2000, scoped, tag = 'output window, operand 0']
    #allocation3 [shape = 's32[2]{0}', space=sflag, size = 0x8, scoped, tag = 'scoped memory for _lambda_.5']
    %12 = vsyncpa [#allocation3], 0
    %s13 = scalar_lea.sflag [#allocation3], 1
    %14 = vsyncpa %s13, 0
    loop: start=0, step=1, limit=4
    $region2: #{_lambda_.5} parent=1 // loop_pre_header
      _
    $region3: #{_lambda_.5} parent=1 // loop_header
      %s16 = sphi 0, %s20
      %p17 = scmp.ge.s32.totalorder %s16, 4
      %s26 = sphi 0, %s28
      %s29 = sphi 0, %s26
      %s30 = sphi 0, %s29
      %s46 = sphi 0, %s30
      %s50 = sphi 0, %s50
      %s52 = sphi 0, %s50
      %s53 = sphi 0, %s52
      %s67 = sphi 0, %s53
      %s71 = sphi 0, %s71
      %s73 = sphi 0, %s71
      %s74 = sphi 0, %s73
      %s88 = sphi 0, %s74
      %s92 = sphi 0, %s92
      %s94 = sphi 0, %s92
      %s95 = sphi 0, %s94
      %s109 = sphi 0, %s95
      %s113 = sphi 0, %s113
      %s115 = sphi 0, %s113
      %s116 = sphi 0, %s115
      %s130 = sphi 0, %s116
      %s134 = sphi 0, %s134
      %s136 = sphi 0, %s134
      %s137 = sphi 0, %s136
      %s151 = sphi 0, %s137
      %s155 = sphi 0, %s155
      %s157 = sphi 0, %s155
      %s158 = sphi 0, %s157
      %s172 = sphi 0, %s158
      %s178 = sphi 0, %s180
      %s181 = sphi 0, %s178
      %s182 = sphi 0, %s181
      %s198 = sphi 0, %s182
    $region4: #{_lambda_.5} parent=1 // loop_header_branch
      %19 = sbr.rel (%p17) target = $region8
    $region5: #{_lambda_.5} parent=1 // loop_body
      %s21 = ssub.s32 %s16, 1
      %s22 = ssub.s32 %s16, 2
      %s23 = sadd.s32 %s16, 1
      %s24 = ssub.s32 %s16, %s23
      %p25 = scmp.eq.s32.totalorder %s24, 0
      %s27 = sadd.s32 %s26, 1
      %s28 = scalar_select %p25, %s26, %s27
      %p31 = pneg %p25
      %p32 = scmp.eq.s32.totalorder %s16, 1
      %p33 = por %p31, %p32
      %p34 = scmp.ne.s32.totalorder %s26, %s29
      %p35 = scmp.eq.s32.totalorder %s16, 0
      %p36 = por %p34, %p35
      %p37 = scmp.ne.s32.totalorder %s26, %s29
      %p38 = scmp.eq.s32.totalorder %s21, 1
      %p39 = por %p37, %p38
      %p40 = scmp.ne.s32.totalorder %s29, %s30
      %p41 = scmp.eq.s32.totalorder %s21, 0
      %p42 = por %p40, %p41
      %p43 = scmp.ne.s32.totalorder %s29, %s30
      %p44 = scmp.eq.s32.totalorder %s22, 1
      %p45 = por %p43, %p44
      %p47 = scmp.ne.s32.totalorder %s30, %s46
      %p48 = scmp.eq.s32.totalorder %s22, 0
      %p49 = por %p47, %p48
      %s51 = sadd.s32 %s50, 1
      %p54 = scmp.eq.s32.totalorder %s16, 1
      %p55 = scmp.ne.s32.totalorder %s50, %s52
      %p56 = scmp.eq.s32.totalorder %s16, 0
      %p57 = por %p55, %p56
      %p58 = scmp.ne.s32.totalorder %s50, %s52
      %p59 = scmp.eq.s32.totalorder %s21, 1
      %p60 = por %p58, %p59
      %p61 = scmp.ne.s32.totalorder %s52, %s53
      %p62 = scmp.eq.s32.totalorder %s21, 0
      %p63 = por %p61, %p62
      %p64 = scmp.ne.s32.totalorder %s52, %s53
      %p65 = scmp.eq.s32.totalorder %s22, 1
      %p66 = por %p64, %p65
      %p68 = scmp.ne.s32.totalorder %s53, %s67
      %p69 = scmp.eq.s32.totalorder %s22, 0
      %p70 = por %p68, %p69
      %s72 = sadd.s32 %s71, 1
      %p75 = scmp.eq.s32.totalorder %s16, 1
      %p76 = scmp.ne.s32.totalorder %s71, %s73
      %p77 = scmp.eq.s32.totalorder %s16, 0
      %p78 = por %p76, %p77
      %p79 = scmp.ne.s32.totalorder %s71, %s73
      %p80 = scmp.eq.s32.totalorder %s21, 1
      %p81 = por %p79, %p80
      %p82 = scmp.ne.s32.totalorder %s73, %s74
      %p83 = scmp.eq.s32.totalorder %s21, 0
      %p84 = por %p82, %p83
      %p85 = scmp.ne.s32.totalorder %s73, %s74
      %p86 = scmp.eq.s32.totalorder %s22, 1
      %p87 = por %p85, %p86
      %p89 = scmp.ne.s32.totalorder %s74, %s88
      %p90 = scmp.eq.s32.totalorder %s22, 0
      %p91 = por %p89, %p90
      %s93 = sadd.s32 %s92, 1
      %p96 = scmp.eq.s32.totalorder %s16, 1
      %p97 = scmp.ne.s32.totalorder %s92, %s94
      %p98 = scmp.eq.s32.totalorder %s16, 0
      %p99 = por %p97, %p98
      %p100 = scmp.ne.s32.totalorder %s92, %s94
      %p101 = scmp.eq.s32.totalorder %s21, 1
      %p102 = por %p100, %p101
      %p103 = scmp.ne.s32.totalorder %s94, %s95
      %p104 = scmp.eq.s32.totalorder %s21, 0
      %p105 = por %p103, %p104
      %p106 = scmp.ne.s32.totalorder %s94, %s95
      %p107 = scmp.eq.s32.totalorder %s22, 1
      %p108 = por %p106, %p107
      %p110 = scmp.ne.s32.totalorder %s95, %s109
      %p111 = scmp.eq.s32.totalorder %s22, 0
      %p112 = por %p110, %p111
      %s114 = sadd.s32 %s113, 1
      %p117 = scmp.eq.s32.totalorder %s16, 1
      %p118 = scmp.ne.s32.totalorder %s113, %s115
      %p119 = scmp.eq.s32.totalorder %s16, 0
      %p120 = por %p118, %p119
      %p121 = scmp.ne.s32.totalorder %s113, %s115
      %p122 = scmp.eq.s32.totalorder %s21, 1
      %p123 = por %p121, %p122
      %p124 = scmp.ne.s32.totalorder %s115, %s116
      %p125 = scmp.eq.s32.totalorder %s21, 0
      %p126 = por %p124, %p125
      %p127 = scmp.ne.s32.totalorder %s115, %s116
      %p128 = scmp.eq.s32.totalorder %s22, 1
      %p129 = por %p127, %p128
      %p131 = scmp.ne.s32.totalorder %s116, %s130
      %p132 = scmp.eq.s32.totalorder %s22, 0
      %p133 = por %p131, %p132
      %s135 = sadd.s32 %s134, 1
      %p138 = scmp.eq.s32.totalorder %s16, 1
      %p139 = scmp.ne.s32.totalorder %s134, %s136
      %p140 = scmp.eq.s32.totalorder %s16, 0
      %p141 = por %p139, %p140
      %p142 = scmp.ne.s32.totalorder %s134, %s136
      %p143 = scmp.eq.s32.totalorder %s21, 1
      %p144 = por %p142, %p143
      %p145 = scmp.ne.s32.totalorder %s136, %s137
      %p146 = scmp.eq.s32.totalorder %s21, 0
      %p147 = por %p145, %p146
      %p148 = scmp.ne.s32.totalorder %s136, %s137
      %p149 = scmp.eq.s32.totalorder %s22, 1
      %p150 = por %p148, %p149
      %p152 = scmp.ne.s32.totalorder %s137, %s151
      %p153 = scmp.eq.s32.totalorder %s22, 0
      %p154 = por %p152, %p153
      %s156 = sadd.s32 %s155, 1
      %p159 = scmp.eq.s32.totalorder %s16, 1
      %p160 = scmp.ne.s32.totalorder %s155, %s157
      %p161 = scmp.eq.s32.totalorder %s16, 0
      %p162 = por %p160, %p161
      %p163 = scmp.ne.s32.totalorder %s155, %s157
      %p164 = scmp.eq.s32.totalorder %s21, 1
      %p165 = por %p163, %p164
      %p166 = scmp.ne.s32.totalorder %s157, %s158
      %p167 = scmp.eq.s32.totalorder %s21, 0
      %p168 = por %p166, %p167
      %p169 = scmp.ne.s32.totalorder %s157, %s158
      %p170 = scmp.eq.s32.totalorder %s22, 1
      %p171 = por %p169, %p170
      %p173 = scmp.ne.s32.totalorder %s158, %s172
      %p174 = scmp.eq.s32.totalorder %s22, 0
      %p175 = por %p173, %p174
      %s176 = ssub.s32 %s16, %s23
      %p177 = scmp.eq.s32.totalorder %s176, 0
      %s179 = sadd.s32 %s178, 1
      %s180 = scalar_select %p177, %s178, %s179
      %p183 = pneg %p177
      %p184 = scmp.eq.s32.totalorder %s16, 1
      %p185 = por %p183, %p184
      %p186 = scmp.ne.s32.totalorder %s178, %s181
      %p187 = scmp.eq.s32.totalorder %s16, 0
      %p188 = por %p186, %p187
      %p189 = scmp.ne.s32.totalorder %s178, %s181
      %p190 = scmp.eq.s32.totalorder %s21, 1
      %p191 = por %p189, %p190
      %p192 = scmp.ne.s32.totalorder %s181, %s182
      %p193 = scmp.eq.s32.totalorder %s21, 0
      %p194 = por %p192, %p193
      %p195 = scmp.ne.s32.totalorder %s181, %s182
      %p196 = scmp.eq.s32.totalorder %s22, 1
      %p197 = por %p195, %p196
      %p199 = scmp.ne.s32.totalorder %s182, %s198
      %p200 = scmp.eq.s32.totalorder %s22, 0
      %p201 = por %p199, %p200
      %p202 = scmp.le.s32.totalorder 1, %s16
      %p203 = scmp.lt.s32.totalorder %s16, 3
      %p204 = pnand %p202, %p203
      %p205 = pneg %p204
      // Predicated region
      $region9: #{_lambda_.5} parent=5 // pred_check
        _
      $region10: #{_lambda_.5} parent=5 // pred_check_branch
        %207 = sbr.rel (%p204) target = $region12
      $region11: #{_lambda_.5} parent=5 // pred_region
        %s208 = ssub.s32 %s16, 1
        // Predicated region
        $region13: #{_lambda_.5} parent=11 // pred_check
          %p209 = pneg %p63
        $region14: #{_lambda_.5} parent=11 // pred_check_branch
          %211 = sbr.rel (%p209) target = $region16
        $region15: #{_lambda_.5} parent=11 // pred_region
          _
        $region16: #{_lambda_.5} parent=11 // pred_fallthru
          _
        // Predicated region
        $region17: #{_lambda_.5} parent=11 // pred_check
          %p212 = pneg %p84
        $region18: #{_lambda_.5} parent=11 // pred_check_branch
          %214 = sbr.rel (%p212) target = $region20
        $region19: #{_lambda_.5} parent=11 // pred_region
          _
        $region20: #{_lambda_.5} parent=11 // pred_fallthru
          _
        // Predicated region
        $region21: #{_lambda_.5} parent=11 // pred_check
          %p215 = pneg %p105
        $region22: #{_lambda_.5} parent=11 // pred_check_branch
          %217 = sbr.rel (%p215) target = $region24
        $region23: #{_lambda_.5} parent=11 // pred_region
          _
        $region24: #{_lambda_.5} parent=11 // pred_fallthru
          _
        // Predicated region
        $region25: #{_lambda_.5} parent=11 // pred_check
          %p218 = pneg %p126
        $region26: #{_lambda_.5} parent=11 // pred_check_branch
          %220 = sbr.rel (%p218) target = $region28
        $region27: #{_lambda_.5} parent=11 // pred_region
          _
        $region28: #{_lambda_.5} parent=11 // pred_fallthru
          _
        // Predicated region
        $region29: #{_lambda_.5} parent=11 // pred_check
          %p221 = pneg %p147
        $region30: #{_lambda_.5} parent=11 // pred_check_branch
          %223 = sbr.rel (%p221) target = $region32
        $region31: #{_lambda_.5} parent=11 // pred_region
          _
        $region32: #{_lambda_.5} parent=11 // pred_fallthru
          _
        // Predicated region
        $region33: #{_lambda_.5} parent=11 // pred_check
          %p224 = pneg %p168
        $region34: #{_lambda_.5} parent=11 // pred_check_branch
          %226 = sbr.rel (%p224) target = $region36
        $region35: #{_lambda_.5} parent=11 // pred_region
          _
        $region36: #{_lambda_.5} parent=11 // pred_fallthru
          _
      $region12: #{_lambda_.5} parent=5 // pred_fallthru
        _
      %p227 = scmp.lt.s32.totalorder %s16, 2
      // Predicated region
      $region37: #{_lambda_.5} parent=5 // pred_check
        %p228 = pneg %p227
      $region38: #{_lambda_.5} parent=5 // pred_check_branch
        %230 = sbr.rel (%p228) target = $region40
      $region39: #{_lambda_.5} parent=5 // pred_region
        // Predicated region
        $region41: #{_lambda_.5} parent=39 // pred_check
          %p231 = pneg %p36
        $region42: #{_lambda_.5} parent=39 // pred_check_branch
          %233 = sbr.rel (%p231) target = $region44
        $region43: #{_lambda_.5} parent=39 // pred_region
          %p234 = scmp.lt.s32.totalorder %s16, 1
          %s235 = scalar_select %p234, %s16, 1
          %s236 = smul.addr %s235, 8
          %s237 = scalar_lea.vmem %s0, %s236
        $region44: #{_lambda_.5} parent=39 // pred_fallthru
          _
      $region40: #{_lambda_.5} parent=5 // pred_fallthru
        _
      %p238 = scmp.le.s32.totalorder 1, %s16
      %p239 = scmp.lt.s32.totalorder %s16, 3
      %p240 = pnand %p238, %p239
      %p241 = pneg %p240
      // Predicated region
      $region45: #{_lambda_.5} parent=5 // pred_check
        _
      $region46: #{_lambda_.5} parent=5 // pred_check_branch
        %243 = sbr.rel (%p240) target = $region48
      $region47: #{_lambda_.5} parent=5 // pred_region
        %s244 = ssub.s32 %s16, 1
        %p245 = scmp.lt.s32.totalorder %s21, 1
        %s246 = scalar_select %p245, %s21, 1
        %s247 = smul.addr %s246, 8
        %s248 = scalar_lea.vmem %s0, %s247
        %p249 = pneg %p42
        %p250 = pneg %p39
        %p251 = pneg %p63
        %p252 = pneg %p60
        %p253 = pneg %p84
        %p254 = pneg %p81
        %p255 = pneg %p105
        %p256 = pneg %p102
        %p257 = pneg %p126
        %p258 = pneg %p123
        %p259 = pneg %p147
        %p260 = pneg %p144
        %p261 = pneg %p168
        %p262 = pneg %p165
        %p263 = pneg %p194
        %p264 = pneg %p191
        %s265 = sand.u32 %s181, 1
        %s266 = scalar_lea.sflag [#allocation3], %s265
        %s267 = sand.u32 %s181, 1
        %s268 = smul.addr %s267, 8
        %s269 = scalar_lea.vmem [#allocation2], %s268
        %p270 = scmp.lt.s32.totalorder %s21, 1
        %s271 = scalar_select %p270, %s21, 1
        %s272 = smul.addr %s271, 8
        %s273 = scalar_lea.vmem %s0, %s272
        %v274 = vld [vmem:[%s273] sm:$0xff]
        %v275 = vld [vmem:[%s1] sm:$0xff]
        %v276 = vld [vmem:[%s1 + $0x8] sm:$0xff]
        %v277 = vld [vmem:[%s1 + $0x10] sm:$0xff]
        %v278 = vld [vmem:[%s1 + $0x18] sm:$0xff]
        %v279 = vld [vmem:[%s2] sm:$0x1]
        %v281 = vlaneseq
        %v282 = vshrl.u32 %v281, 7
        %v283 = vsub.s32 0, %v282
        %v284 = vrot.slane %v279, %v283
        %vm286 = vcmask 261120
        %v288 = vsel %vm286, %v274, 0
        %290 = vmatprep.subr.mxu0 0.0
        %291 = vmatpush1.msra.mxu0 0.0
        %292 = vmatprep.subr.mxu0 0.0
        %293 = vmatpush1.msra.mxu0 0.0
        %294 = vmatprep.subr.mxu0 0.0
        %295 = vmatpush1.msra.mxu0 0.0
        %296 = vmatprep.subr.mxu0 0.0
        %297 = vmatpush1.msra.mxu0 0.0
        %298 = vmatprep.subr.mxu0 0.0
        %299 = vmatpush1.msra.mxu0 0.0
        %300 = vmatprep.subr.mxu0 0.0
        %301 = vmatpush1.msra.mxu0 0.0
        %302 = vmatprep.subr.mxu0 0.0
        %303 = vmatpush1.msra.mxu0 0.0
        %304 = vmatprep.subr.mxu0 0.0
        %305 = vmatpush1.msra.mxu0 0.0
        %306 = vmatprep.subr.mxu0 0.0
        %307 = vmatpush1.msra.mxu0 0.0
        %308 = vmatprep.subr.mxu0 0.0
        %309 = vmatpush1.msra.mxu0 0.0
        %310 = vmatprep.subr.mxu0 0.0
        %311 = vmatpush1.msra.mxu0 0.0
        %312 = vmatprep.subr.mxu0 0.0
        %313 = vmatpush1.msra.mxu0 0.0
        %314 = vmatprep.subr.mxu0 0.0
        %315 = vmatpush1.msra.mxu0 %v278
        %316 = vmatprep.subr.mxu0 0.0
        %317 = vmatpush1.msra.mxu0 %v277
        %318 = vmatprep.subr.mxu0 0.0
        %319 = vmatpush1.msra.mxu0 %v276
        %320 = vmatprep.subr.mxu0 0.0
        %321 = vmatpush1.msra.mxu0 %v275
        %322 = vmatprep.subr.mxu0 0.0
        %323 = vmatpush2.msra.mxu0 0.0
        %324 = vmatprep.subr.mxu0 0.0
        %325 = vmatpush2.msra.mxu0 0.0
        %326 = vmatprep.subr.mxu0 0.0
        %327 = vmatpush2.msra.mxu0 0.0
        %328 = vmatprep.subr.mxu0 0.0
        %329 = vmatpush2.msra.mxu0 0.0
        %330 = vmatprep.subr.mxu0 0.0
        %331 = vmatpush2.msra.mxu0 0.0
        %332 = vmatprep.subr.mxu0 0.0
        %333 = vmatpush2.msra.mxu0 0.0
        %334 = vmatprep.subr.mxu0 0.0
        %335 = vmatpush2.msra.mxu0 0.0
        %336 = vmatprep.subr.mxu0 0.0
        %337 = vmatpush2.msra.mxu0 0.0
        %338 = vmatprep.subr.mxu0 0.0
        %339 = vmatpush2.msra.mxu0 0.0
        %340 = vmatprep.subr.mxu0 0.0
        %341 = vmatpush2.msra.mxu0 0.0
        %342 = vmatprep.subr.mxu0 0.0
        %343 = vmatpush2.msra.mxu0 0.0
        %344 = vmatprep.subr.mxu0 0.0
        %345 = vmatpush2.msra.mxu0 0.0
        %346 = vmatprep.subr.mxu0 0.0
        %347 = vmatpush2.msra.mxu0 0.0
        %348 = vmatprep.subr.mxu0 0.0
        %349 = vmatpush2.msra.mxu0 0.0
        %350 = vmatprep.subr.mxu0 0.0
        %351 = vmatpush2.msra.mxu0 0.0
        %352 = vmatprep.subr.mxu0 0.0
        %353 = vmatpush2.msra.mxu0 0.0
        %354 = vmatprep.mubr.f32.mxu0 0.0
        %355 = vmatmul.mubr.f32.gmra.mxu0 %v288
        %v356 = vpop.f32.mrf.mxu0
        %v357 = vadd.f32 %v284, %v356
        %v358 = vpop.f32.mrf.mxu0
        %359 = vdwg.mxu0
        %v360 = vmax.f32 %v357, 0.0
        %v361 = vld [vmem:[%s3] sm:$0xff]
        %v362 = vld [vmem:[%s3 + $0x8] sm:$0xff]
        %v363 = vld [vmem:[%s3 + $0x10] sm:$0xff]
        %v364 = vld [vmem:[%s3 + $0x18] sm:$0xff]
        %v365 = vld [vmem:[%s3 + $0x20] sm:$0xff]
        %v366 = vld [vmem:[%s3 + $0x28] sm:$0xff]
        %v367 = vld [vmem:[%s3 + $0x30] sm:$0xff]
        %v368 = vld [vmem:[%s3 + $0x38] sm:$0xff]
        %v369 = vld [vmem:[%s4] sm:$0x1]
        %v371 = vlaneseq
        %v372 = vshrl.u32 %v371, 7
        %v373 = vsub.s32 0, %v372
        %v374 = vrot.slane %v369, %v373
        %vm376 = vcmask 523264
        %v378 = vsel %vm376, %v360, 0
        %380 = vmatprep.subr.mxu0 0.0
        %381 = vmatpush1.msra.mxu0 0.0
        %382 = vmatprep.subr.mxu0 0.0
        %383 = vmatpush1.msra.mxu0 0.0
        %384 = vmatprep.subr.mxu0 0.0
        %385 = vmatpush1.msra.mxu0 0.0
        %386 = vmatprep.subr.mxu0 0.0
        %387 = vmatpush1.msra.mxu0 0.0
        %388 = vmatprep.subr.mxu0 0.0
        %389 = vmatpush1.msra.mxu0 0.0
        %390 = vmatprep.subr.mxu0 0.0
        %391 = vmatpush1.msra.mxu0 0.0
        %392 = vmatprep.subr.mxu0 0.0
        %393 = vmatpush1.msra.mxu0 0.0
        %394 = vmatprep.subr.mxu0 0.0
        %395 = vmatpush1.msra.mxu0 0.0
        %396 = vmatprep.subr.mxu0 0.0
        %397 = vmatpush1.msra.mxu0 %v368
        %398 = vmatprep.subr.mxu0 0.0
        %399 = vmatpush1.msra.mxu0 %v367
        %400 = vmatprep.subr.mxu0 0.0
        %401 = vmatpush1.msra.mxu0 %v366
        %402 = vmatprep.subr.mxu0 0.0
        %403 = vmatpush1.msra.mxu0 %v365
        %404 = vmatprep.subr.mxu0 0.0
        %405 = vmatpush1.msra.mxu0 %v364
        %406 = vmatprep.subr.mxu0 0.0
        %407 = vmatpush1.msra.mxu0 %v363
        %408 = vmatprep.subr.mxu0 0.0
        %409 = vmatpush1.msra.mxu0 %v362
        %410 = vmatprep.subr.mxu0 0.0
        %411 = vmatpush1.msra.mxu0 %v361
        %412 = vmatprep.subr.mxu0 0.0
        %413 = vmatpush2.msra.mxu0 0.0
        %414 = vmatprep.subr.mxu0 0.0
        %415 = vmatpush2.msra.mxu0 0.0
        %416 = vmatprep.subr.mxu0 0.0
        %417 = vmatpush2.msra.mxu0 0.0
        %418 = vmatprep.subr.mxu0 0.0
        %419 = vmatpush2.msra.mxu0 0.0
        %420 = vmatprep.subr.mxu0 0.0
        %421 = vmatpush2.msra.mxu0 0.0
        %422 = vmatprep.subr.mxu0 0.0
        %423 = vmatpush2.msra.mxu0 0.0
        %424 = vmatprep.subr.mxu0 0.0
        %425 = vmatpush2.msra.mxu0 0.0
        %426 = vmatprep.subr.mxu0 0.0
        %427 = vmatpush2.msra.mxu0 0.0
        %428 = vmatprep.subr.mxu0 0.0
        %429 = vmatpush2.msra.mxu0 0.0
        %430 = vmatprep.subr.mxu0 0.0
        %431 = vmatpush2.msra.mxu0 0.0
        %432 = vmatprep.subr.mxu0 0.0
        %433 = vmatpush2.msra.mxu0 0.0
        %434 = vmatprep.subr.mxu0 0.0
        %435 = vmatpush2.msra.mxu0 0.0
        %436 = vmatprep.subr.mxu0 0.0
        %437 = vmatpush2.msra.mxu0 0.0
        %438 = vmatprep.subr.mxu0 0.0
        %439 = vmatpush2.msra.mxu0 0.0
        %440 = vmatprep.subr.mxu0 0.0
        %441 = vmatpush2.msra.mxu0 0.0
        %442 = vmatprep.subr.mxu0 0.0
        %443 = vmatpush2.msra.mxu0 0.0
        %444 = vmatprep.mubr.f32.mxu0 0.0
        %445 = vmatmul.mubr.f32.gmra.mxu0 %v378
        %v446 = vpop.f32.mrf.mxu0
        %v447 = vadd.f32 %v374, %v446
        %v448 = vpop.f32.mrf.mxu0
        %449 = vdwg.mxu0
        %v450 = vadd.f32 %v274, %v447
        %v451 = vsel %vm286, %v450, 0.0
        %452 = vadd.xlane.f32.xlu0 %v451
        %v453 = vpop.xlane.xlu0 %452
        %v454 = vrcp.pop 32.0
        %v455 = vmul.f32 %v453, %v454
        %v456 = vsub.f32 %v450, %v455
        %v457 = vmul.f32 %v456, %v456
        %v458 = vsel %vm286, %v457, 0.0
        %459 = vadd.xlane.f32.xlu0 %v458
        %v460 = vpop.xlane.xlu0 %459
        %v461 = vmul.f32 %v460, %v454
        %v462 = vadd.f32 %v461, 1e-05
        %v463 = vrsqrt.pop %v462
        %v464 = vmul.f32 %v456, %v463
        %v465 = vld [vmem:[%s5] sm:$0x1]
        %v467 = vlaneseq
        %v468 = vshrl.u32 %v467, 7
        %v469 = vsub.s32 0, %v468
        %v470 = vrot.slane %v465, %v469
        %v472 = vmul.f32 %v464, %v470
        %v473 = vld [vmem:[%s6] sm:$0x1]
        %v475 = vlaneseq
        %v476 = vshrl.u32 %v475, 7
        %v477 = vsub.s32 0, %v476
        %v478 = vrot.slane %v473, %v477
        %v480 = vadd.f32 %v472, %v478
        %481 = vst.msk [vmem:[%s269] sm:$0xff] %vm286, %v480
        %s482 = sand.u32 %s181, 1
        %s483 = scalar_lea.sflag [#allocation3], %s482
        %s484 = sand.u32 %s181, 1
        %s485 = smul.addr %s484, 8
        %s486 = scalar_lea.vmem [#allocation2], %s485
        // Predicated region
        $region49: #{_lambda_.5} parent=47 // pred_check
          %p487 = pneg %p191
        $region50: #{_lambda_.5} parent=47 // pred_check_branch
          %489 = sbr.rel (%p487) target = $region52
        $region51: #{_lambda_.5} parent=47 // pred_region
          %s491 = ssub.s32 128, 128
          %492 = vsyncadd %s483, %s491
          %s493 = smul.addr %s21, 128
          %s494 = scalar_lea.hbm %s7, %s493
          %s496 = sshll.u32 %s486, 4
          %s497 = int_to_ptr.vmem [resolvable:$true] %s496
          %499 = dma.vmem_to_hbm [thread:$0]  %s497, 128, %s494, %s483
        $region52: #{_lambda_.5} parent=47 // pred_fallthru
          _
      $region48: #{_lambda_.5} parent=5 // pred_fallthru
        _
      %p500 = scmp.le.s32.totalorder 2, %s16
      // Predicated region
      $region53: #{_lambda_.5} parent=5 // pred_check
        %p501 = pneg %p500
      $region54: #{_lambda_.5} parent=5 // pred_check_branch
        %503 = sbr.rel (%p501) target = $region56
      $region55: #{_lambda_.5} parent=5 // pred_region
        %s504 = ssub.s32 %s16, 2
        // Predicated region
        $region57: #{_lambda_.5} parent=55 // pred_check
          %p505 = pneg %p197
        $region58: #{_lambda_.5} parent=55 // pred_check_branch
          %507 = sbr.rel (%p505) target = $region60
        $region59: #{_lambda_.5} parent=55 // pred_region
          %s508 = sand.u32 %s182, 1
          %s509 = scalar_lea.sflag [#allocation3], %s508
          %s510 = sand.u32 %s182, 1
          %s511 = smul.addr %s510, 8
          %s512 = scalar_lea.vmem [#allocation2], %s511
          %513 = dma.done %s509, 128
        $region60: #{_lambda_.5} parent=55 // pred_fallthru
          _
      $region56: #{_lambda_.5} parent=5 // pred_fallthru
        _
    $region6: #{_lambda_.5} parent=1 // loop_footer
      %s20 = sadd.s32 1, %s16
    $region7: #{_lambda_.5} parent=1 // loop_footer_branch
      %15 = sbr.rel target = $region3
    $region8: #{_lambda_.5} parent=1 // loop_exit
      _
    %514 = vsyncpa [#allocation3], 1
    %s515 = scalar_lea.sflag [#allocation3], 1
    %516 = vsyncpa %s515, 1

// kernel: _lambda_.4
$region0: #{_lambda_.4}
  #allocation0 [shape = 'u32[]', space=smem, size = 0x4, offset = 0x4, fixed_abs, tag = 'smem constant byte address 0x4 - core index']
  #allocation1 [shape = 'u32[144,128]{1,0:T(1,128)}', space=vmem, size = 0x12000, scoped, tag = 'internal scratch']
  %s0 = inlined_call_operand.vmem [shape: f32[2,8,32], index: 0, kind: input, shape index: {}, may-alias: {0,1}]
  %s1 = inlined_call_operand.vmem [shape: f32[2,8,32], index: 1, kind: input, shape index: {}, may-alias: {0,1}]
  %s2 = inlined_call_operand.vmem [shape: f32[8,8], index: 2, kind: input, shape index: {}]
  %s3 = inlined_call_operand.vmem [shape: f32[32,32], index: 3, kind: input, shape index: {}]
  %s4 = inlined_call_operand.vmem [shape: f32[1,32], index: 4, kind: input, shape index: {}, may-alias: {4,6,8,10,12}]
  %s5 = inlined_call_operand.hbm [shape: f32[32,32], index: 5, kind: input, shape index: {}]
  %s6 = inlined_call_operand.vmem [shape: f32[1,32], index: 6, kind: input, shape index: {}, may-alias: {4,6,8,10,12}]
  %s7 = inlined_call_operand.hbm [shape: f32[32,32], index: 7, kind: input, shape index: {}]
  %s8 = inlined_call_operand.vmem [shape: f32[1,32], index: 8, kind: input, shape index: {}, may-alias: {4,6,8,10,12}]
  %s9 = inlined_call_operand.hbm [shape: f32[32,32], index: 9, kind: input, shape index: {}]
  %s10 = inlined_call_operand.vmem [shape: f32[1,32], index: 10, kind: input, shape index: {}, may-alias: {4,6,8,10,12}]
  %s11 = inlined_call_operand.vmem [shape: f32[1,32], index: 11, kind: input, shape index: {}]
  %s12 = inlined_call_operand.vmem [shape: f32[1,32], index: 12, kind: input, shape index: {}, may-alias: {4,6,8,10,12}]
  %s13 = inlined_call_operand.vmem [shape: f32[2,8,32], index: 13, kind: output, shape index: {}]
  %s14 = sld [smem:[#allocation0]]
  $region97: #{_lambda_.4} parent=0
    _
  %s16 = ssub.s32 1, %s14
  %s17 = scalar_select 0, %s16, %s14
  $region1: #{_lambda_.4} parent=0
    #allocation2 [shape = 'u8[16384]{0}', space=vmem, size = 0x4000, scoped, tag = 'input window, operand 5, single buffered']
    #allocation3 [shape = 's32[2]{0}', space=sflag, size = 0x8, scoped, tag = 'scoped memory for _lambda_.4']
    #allocation4 [shape = 'u8[16384]{0}', space=vmem, size = 0x4000, scoped, tag = 'input window, operand 7, single buffered']
    #allocation5 [shape = 's32[1]{0}', space=sflag, size = 0x4, scoped, tag = 'scoped memory for _lambda_.4']
    #allocation6 [shape = 'u8[16384]{0}', space=vmem, size = 0x4000, scoped, tag = 'input window, operand 9, single buffered']
    %18 = vsyncpa [#allocation3], 0
    %19 = vsyncpa [#allocation5], 0
    loop: start=0, step=1, limit=4
    $region2: #{_lambda_.4} parent=1 // loop_pre_header
      _
    $region3: #{_lambda_.4} parent=1 // loop_header
      %s21 = sphi 0, %s25
      %p22 = scmp.ge.s32.totalorder %s21, 4
      %s31 = sphi 0, %s33
      %s34 = sphi 0, %s31
      %s35 = sphi 0, %s34
      %s51 = sphi 0, %s35
      %s57 = sphi 0, %s59
      %s60 = sphi 0, %s57
      %s61 = sphi 0, %s60
      %s77 = sphi 0, %s61
      %s81 = sphi 0, %s81
      %s83 = sphi 0, %s81
      %s84 = sphi 0, %s83
      %s98 = sphi 0, %s84
      %s102 = sphi 0, %s102
      %s104 = sphi 0, %s102
      %s105 = sphi 0, %s104
      %s119 = sphi 0, %s105
      %s123 = sphi 0, %s123
      %s125 = sphi 0, %s123
      %s126 = sphi 0, %s125
      %s140 = sphi 0, %s126
      %s144 = sphi 0, %s144
      %s146 = sphi 0, %s144
      %s147 = sphi 0, %s146
      %s161 = sphi 0, %s147
      %s165 = sphi 0, %s165
      %s167 = sphi 0, %s165
      %s168 = sphi 0, %s167
      %s182 = sphi 0, %s168
      %s186 = sphi 0, %s186
      %s188 = sphi 0, %s186
      %s189 = sphi 0, %s188
      %s203 = sphi 0, %s189
      %s207 = sphi 0, %s207
      %s209 = sphi 0, %s207
      %s210 = sphi 0, %s209
      %s224 = sphi 0, %s210
      %s228 = sphi 0, %s228
      %s230 = sphi 0, %s228
      %s231 = sphi 0, %s230
      %s245 = sphi 0, %s231
      %s249 = sphi 0, %s249
      %s251 = sphi 0, %s249
      %s252 = sphi 0, %s251
      %s266 = sphi 0, %s252
      %s270 = sphi 0, %s270
      %s272 = sphi 0, %s270
      %s273 = sphi 0, %s272
      %s287 = sphi 0, %s273
      %s291 = sphi 0, %s291
      %s293 = sphi 0, %s291
      %s294 = sphi 0, %s293
      %s308 = sphi 0, %s294
      %s314 = sphi 0, %s316
      %s317 = sphi 0, %s314
      %s318 = sphi 0, %s317
      %s334 = sphi 0, %s318
    $region4: #{_lambda_.4} parent=1 // loop_header_branch
      %24 = sbr.rel (%p22) target = $region8
    $region5: #{_lambda_.4} parent=1 // loop_body
      %s26 = ssub.s32 %s21, 1
      %s27 = ssub.s32 %s21, 2
      %s28 = sadd.s32 %s21, 1
      %s29 = ssub.s32 %s21, %s28
      %p30 = scmp.eq.s32.totalorder %s29, 0
      %s32 = sadd.s32 %s31, 1
      %s33 = scalar_select %p30, %s31, %s32
      %p36 = pneg %p30
      %p37 = scmp.eq.s32.totalorder %s21, 1
      %p38 = por %p36, %p37
      %p39 = scmp.ne.s32.totalorder %s31, %s34
      %p40 = scmp.eq.s32.totalorder %s21, 0
      %p41 = por %p39, %p40
      %p42 = scmp.ne.s32.totalorder %s31, %s34
      %p43 = scmp.eq.s32.totalorder %s26, 1
      %p44 = por %p42, %p43
      %p45 = scmp.ne.s32.totalorder %s34, %s35
      %p46 = scmp.eq.s32.totalorder %s26, 0
      %p47 = por %p45, %p46
      %p48 = scmp.ne.s32.totalorder %s34, %s35
      %p49 = scmp.eq.s32.totalorder %s27, 1
      %p50 = por %p48, %p49
      %p52 = scmp.ne.s32.totalorder %s35, %s51
      %p53 = scmp.eq.s32.totalorder %s27, 0
      %p54 = por %p52, %p53
      %s55 = ssub.s32 %s21, %s28
      %p56 = scmp.eq.s32.totalorder %s55, 0
      %s58 = sadd.s32 %s57, 1
      %s59 = scalar_select %p56, %s57, %s58
      %p62 = pneg %p56
      %p63 = scmp.eq.s32.totalorder %s21, 1
      %p64 = por %p62, %p63
      %p65 = scmp.ne.s32.totalorder %s57, %s60
      %p66 = scmp.eq.s32.totalorder %s21, 0
      %p67 = por %p65, %p66
      %p68 = scmp.ne.s32.totalorder %s57, %s60
      %p69 = scmp.eq.s32.totalorder %s26, 1
      %p70 = por %p68, %p69
      %p71 = scmp.ne.s32.totalorder %s60, %s61
      %p72 = scmp.eq.s32.totalorder %s26, 0
      %p73 = por %p71, %p72
      %p74 = scmp.ne.s32.totalorder %s60, %s61
      %p75 = scmp.eq.s32.totalorder %s27, 1
      %p76 = por %p74, %p75
      %p78 = scmp.ne.s32.totalorder %s61, %s77
      %p79 = scmp.eq.s32.totalorder %s27, 0
      %p80 = por %p78, %p79
      %s82 = sadd.s32 %s81, 1
      %p85 = scmp.eq.s32.totalorder %s21, 1
      %p86 = scmp.ne.s32.totalorder %s81, %s83
      %p87 = scmp.eq.s32.totalorder %s21, 0
      %p88 = por %p86, %p87
      %p89 = scmp.ne.s32.totalorder %s81, %s83
      %p90 = scmp.eq.s32.totalorder %s26, 1
      %p91 = por %p89, %p90
      %p92 = scmp.ne.s32.totalorder %s83, %s84
      %p93 = scmp.eq.s32.totalorder %s26, 0
      %p94 = por %p92, %p93
      %p95 = scmp.ne.s32.totalorder %s83, %s84
      %p96 = scmp.eq.s32.totalorder %s27, 1
      %p97 = por %p95, %p96
      %p99 = scmp.ne.s32.totalorder %s84, %s98
      %p100 = scmp.eq.s32.totalorder %s27, 0
      %p101 = por %p99, %p100
      %s103 = sadd.s32 %s102, 1
      %p106 = scmp.eq.s32.totalorder %s21, 1
      %p107 = scmp.ne.s32.totalorder %s102, %s104
      %p108 = scmp.eq.s32.totalorder %s21, 0
      %p109 = por %p107, %p108
      %p110 = scmp.ne.s32.totalorder %s102, %s104
      %p111 = scmp.eq.s32.totalorder %s26, 1
      %p112 = por %p110, %p111
      %p113 = scmp.ne.s32.totalorder %s104, %s105
      %p114 = scmp.eq.s32.totalorder %s26, 0
      %p115 = por %p113, %p114
      %p116 = scmp.ne.s32.totalorder %s104, %s105
      %p117 = scmp.eq.s32.totalorder %s27, 1
      %p118 = por %p116, %p117
      %p120 = scmp.ne.s32.totalorder %s105, %s119
      %p121 = scmp.eq.s32.totalorder %s27, 0
      %p122 = por %p120, %p121
      %s124 = sadd.s32 %s123, 1
      %p127 = scmp.eq.s32.totalorder %s21, 1
      %p128 = scmp.ne.s32.totalorder %s123, %s125
      %p129 = scmp.eq.s32.totalorder %s21, 0
      %p130 = por %p128, %p129
      %p131 = scmp.ne.s32.totalorder %s123, %s125
      %p132 = scmp.eq.s32.totalorder %s26, 1
      %p133 = por %p131, %p132
      %p134 = scmp.ne.s32.totalorder %s125, %s126
      %p135 = scmp.eq.s32.totalorder %s26, 0
      %p136 = por %p134, %p135
      %p137 = scmp.ne.s32.totalorder %s125, %s126
      %p138 = scmp.eq.s32.totalorder %s27, 1
      %p139 = por %p137, %p138
      %p141 = scmp.ne.s32.totalorder %s126, %s140
      %p142 = scmp.eq.s32.totalorder %s27, 0
      %p143 = por %p141, %p142
      %s145 = sadd.s32 %s144, 1
      %p148 = scmp.eq.s32.totalorder %s21, 1
      %p149 = scmp.ne.s32.totalorder %s144, %s146
      %p150 = scmp.eq.s32.totalorder %s21, 0
      %p151 = por %p149, %p150
      %p152 = scmp.ne.s32.totalorder %s144, %s146
      %p153 = scmp.eq.s32.totalorder %s26, 1
      %p154 = por %p152, %p153
      %p155 = scmp.ne.s32.totalorder %s146, %s147
      %p156 = scmp.eq.s32.totalorder %s26, 0
      %p157 = por %p155, %p156
      %p158 = scmp.ne.s32.totalorder %s146, %s147
      %p159 = scmp.eq.s32.totalorder %s27, 1
      %p160 = por %p158, %p159
      %p162 = scmp.ne.s32.totalorder %s147, %s161
      %p163 = scmp.eq.s32.totalorder %s27, 0
      %p164 = por %p162, %p163
      %s166 = sadd.s32 %s165, 1
      %p169 = scmp.eq.s32.totalorder %s21, 1
      %p170 = scmp.ne.s32.totalorder %s165, %s167
      %p171 = scmp.eq.s32.totalorder %s21, 0
      %p172 = por %p170, %p171
      %p173 = scmp.ne.s32.totalorder %s165, %s167
      %p174 = scmp.eq.s32.totalorder %s26, 1
      %p175 = por %p173, %p174
      %p176 = scmp.ne.s32.totalorder %s167, %s168
      %p177 = scmp.eq.s32.totalorder %s26, 0
      %p178 = por %p176, %p177
      %p179 = scmp.ne.s32.totalorder %s167, %s168
      %p180 = scmp.eq.s32.totalorder %s27, 1
      %p181 = por %p179, %p180
      %p183 = scmp.ne.s32.totalorder %s168, %s182
      %p184 = scmp.eq.s32.totalorder %s27, 0
      %p185 = por %p183, %p184
      %s187 = sadd.s32 %s186, 1
      %p190 = scmp.eq.s32.totalorder %s21, 1
      %p191 = scmp.ne.s32.totalorder %s186, %s188
      %p192 = scmp.eq.s32.totalorder %s21, 0
      %p193 = por %p191, %p192
      %p194 = scmp.ne.s32.totalorder %s186, %s188
      %p195 = scmp.eq.s32.totalorder %s26, 1
      %p196 = por %p194, %p195
      %p197 = scmp.ne.s32.totalorder %s188, %s189
      %p198 = scmp.eq.s32.totalorder %s26, 0
      %p199 = por %p197, %p198
      %p200 = scmp.ne.s32.totalorder %s188, %s189
      %p201 = scmp.eq.s32.totalorder %s27, 1
      %p202 = por %p200, %p201
      %p204 = scmp.ne.s32.totalorder %s189, %s203
      %p205 = scmp.eq.s32.totalorder %s27, 0
      %p206 = por %p204, %p205
      %s208 = sadd.s32 %s207, 1
      %p211 = scmp.eq.s32.totalorder %s21, 1
      %p212 = scmp.ne.s32.totalorder %s207, %s209
      %p213 = scmp.eq.s32.totalorder %s21, 0
      %p214 = por %p212, %p213
      %p215 = scmp.ne.s32.totalorder %s207, %s209
      %p216 = scmp.eq.s32.totalorder %s26, 1
      %p217 = por %p215, %p216
      %p218 = scmp.ne.s32.totalorder %s209, %s210
      %p219 = scmp.eq.s32.totalorder %s26, 0
      %p220 = por %p218, %p219
      %p221 = scmp.ne.s32.totalorder %s209, %s210
      %p222 = scmp.eq.s32.totalorder %s27, 1
      %p223 = por %p221, %p222
      %p225 = scmp.ne.s32.totalorder %s210, %s224
      %p226 = scmp.eq.s32.totalorder %s27, 0
      %p227 = por %p225, %p226
      %s229 = sadd.s32 %s228, 1
      %p232 = scmp.eq.s32.totalorder %s21, 1
      %p233 = scmp.ne.s32.totalorder %s228, %s230
      %p234 = scmp.eq.s32.totalorder %s21, 0
      %p235 = por %p233, %p234
      %p236 = scmp.ne.s32.totalorder %s228, %s230
      %p237 = scmp.eq.s32.totalorder %s26, 1
      %p238 = por %p236, %p237
      %p239 = scmp.ne.s32.totalorder %s230, %s231
      %p240 = scmp.eq.s32.totalorder %s26, 0
      %p241 = por %p239, %p240
      %p242 = scmp.ne.s32.totalorder %s230, %s231
      %p243 = scmp.eq.s32.totalorder %s27, 1
      %p244 = por %p242, %p243
      %p246 = scmp.ne.s32.totalorder %s231, %s245
      %p247 = scmp.eq.s32.totalorder %s27, 0
      %p248 = por %p246, %p247
      %s250 = sadd.s32 %s249, 1
      %p253 = scmp.eq.s32.totalorder %s21, 1
      %p254 = scmp.ne.s32.totalorder %s249, %s251
      %p255 = scmp.eq.s32.totalorder %s21, 0
      %p256 = por %p254, %p255
      %p257 = scmp.ne.s32.totalorder %s249, %s251
      %p258 = scmp.eq.s32.totalorder %s26, 1
      %p259 = por %p257, %p258
      %p260 = scmp.ne.s32.totalorder %s251, %s252
      %p261 = scmp.eq.s32.totalorder %s26, 0
      %p262 = por %p260, %p261
      %p263 = scmp.ne.s32.totalorder %s251, %s252
      %p264 = scmp.eq.s32.totalorder %s27, 1
      %p265 = por %p263, %p264
      %p267 = scmp.ne.s32.totalorder %s252, %s266
      %p268 = scmp.eq.s32.totalorder %s27, 0
      %p269 = por %p267, %p268
      %s271 = sadd.s32 %s270, 1
      %p274 = scmp.eq.s32.totalorder %s21, 1
      %p275 = scmp.ne.s32.totalorder %s270, %s272
      %p276 = scmp.eq.s32.totalorder %s21, 0
      %p277 = por %p275, %p276
      %p278 = scmp.ne.s32.totalorder %s270, %s272
      %p279 = scmp.eq.s32.totalorder %s26, 1
      %p280 = por %p278, %p279
      %p281 = scmp.ne.s32.totalorder %s272, %s273
      %p282 = scmp.eq.s32.totalorder %s26, 0
      %p283 = por %p281, %p282
      %p284 = scmp.ne.s32.totalorder %s272, %s273
      %p285 = scmp.eq.s32.totalorder %s27, 1
      %p286 = por %p284, %p285
      %p288 = scmp.ne.s32.totalorder %s273, %s287
      %p289 = scmp.eq.s32.totalorder %s27, 0
      %p290 = por %p288, %p289
      %s292 = sadd.s32 %s291, 1
      %p295 = scmp.eq.s32.totalorder %s21, 1
      %p296 = scmp.ne.s32.totalorder %s291, %s293
      %p297 = scmp.eq.s32.totalorder %s21, 0
      %p298 = por %p296, %p297
      %p299 = scmp.ne.s32.totalorder %s291, %s293
      %p300 = scmp.eq.s32.totalorder %s26, 1
      %p301 = por %p299, %p300
      %p302 = scmp.ne.s32.totalorder %s293, %s294
      %p303 = scmp.eq.s32.totalorder %s26, 0
      %p304 = por %p302, %p303
      %p305 = scmp.ne.s32.totalorder %s293, %s294
      %p306 = scmp.eq.s32.totalorder %s27, 1
      %p307 = por %p305, %p306
      %p309 = scmp.ne.s32.totalorder %s294, %s308
      %p310 = scmp.eq.s32.totalorder %s27, 0
      %p311 = por %p309, %p310
      %s312 = ssub.s32 %s21, %s28
      %p313 = scmp.eq.s32.totalorder %s312, 0
      %s315 = sadd.s32 %s314, 1
      %s316 = scalar_select %p313, %s314, %s315
      %p319 = pneg %p313
      %p320 = scmp.eq.s32.totalorder %s21, 1
      %p321 = por %p319, %p320
      %p322 = scmp.ne.s32.totalorder %s314, %s317
      %p323 = scmp.eq.s32.totalorder %s21, 0
      %p324 = por %p322, %p323
      %p325 = scmp.ne.s32.totalorder %s314, %s317
      %p326 = scmp.eq.s32.totalorder %s26, 1
      %p327 = por %p325, %p326
      %p328 = scmp.ne.s32.totalorder %s317, %s318
      %p329 = scmp.eq.s32.totalorder %s26, 0
      %p330 = por %p328, %p329
      %p331 = scmp.ne.s32.totalorder %s317, %s318
      %p332 = scmp.eq.s32.totalorder %s27, 1
      %p333 = por %p331, %p332
      %p335 = scmp.ne.s32.totalorder %s318, %s334
      %p336 = scmp.eq.s32.totalorder %s27, 0
      %p337 = por %p335, %p336
      %p338 = scmp.le.s32.totalorder 1, %s21
      %p339 = scmp.lt.s32.totalorder %s21, 3
      %p340 = pnand %p338, %p339
      %p341 = pneg %p340
      // Predicated region
      $region9: #{_lambda_.4} parent=5 // pred_check
        _
      $region10: #{_lambda_.4} parent=5 // pred_check_branch
        %343 = sbr.rel (%p340) target = $region12
      $region11: #{_lambda_.4} parent=5 // pred_region
        %s344 = ssub.s32 %s21, 1
        // Predicated region
        $region13: #{_lambda_.4} parent=11 // pred_check
          %p345 = pneg %p94
        $region14: #{_lambda_.4} parent=11 // pred_check_branch
          %347 = sbr.rel (%p345) target = $region16
        $region15: #{_lambda_.4} parent=11 // pred_region
          _
        $region16: #{_lambda_.4} parent=11 // pred_fallthru
          _
        // Predicated region
        $region17: #{_lambda_.4} parent=11 // pred_check
          %p348 = pneg %p115
        $region18: #{_lambda_.4} parent=11 // pred_check_branch
          %350 = sbr.rel (%p348) target = $region20
        $region19: #{_lambda_.4} parent=11 // pred_region
          _
        $region20: #{_lambda_.4} parent=11 // pred_fallthru
          _
        // Predicated region
        $region21: #{_lambda_.4} parent=11 // pred_check
          %p351 = pneg %p136
        $region22: #{_lambda_.4} parent=11 // pred_check_branch
          %353 = sbr.rel (%p351) target = $region24
        $region23: #{_lambda_.4} parent=11 // pred_region
          _
        $region24: #{_lambda_.4} parent=11 // pred_fallthru
          _
        // Predicated region
        $region25: #{_lambda_.4} parent=11 // pred_check
          %p354 = pneg %p157
        $region26: #{_lambda_.4} parent=11 // pred_check_branch
          %356 = sbr.rel (%p354) target = $region28
        $region27: #{_lambda_.4} parent=11 // pred_region
          %s358 = ssub.s32 512, 512
          %359 = vsyncadd [#allocation3], %s358
          %s360 = sshll.u32 [#allocation2], 4
          %s361 = int_to_ptr.vmem [resolvable:$true] %s360
          %366 = dma.hbm_to_vmem [thread:$0]  %s5, 512, %s361, [#allocation3], 128, 128, 8
        $region28: #{_lambda_.4} parent=11 // pred_fallthru
          _
        // Predicated region
        $region29: #{_lambda_.4} parent=11 // pred_check
          %p367 = pneg %p178
        $region30: #{_lambda_.4} parent=11 // pred_check_branch
          %369 = sbr.rel (%p367) target = $region32
        $region31: #{_lambda_.4} parent=11 // pred_region
          _
        $region32: #{_lambda_.4} parent=11 // pred_fallthru
          _
        // Predicated region
        $region33: #{_lambda_.4} parent=11 // pred_check
          %p370 = pneg %p199
        $region34: #{_lambda_.4} parent=11 // pred_check_branch
          %372 = sbr.rel (%p370) target = $region36
        $region35: #{_lambda_.4} parent=11 // pred_region
          %s374 = ssub.s32 512, 512
          %375 = vsyncadd [#allocation5], %s374
          %s376 = sshll.u32 [#allocation4], 4
          %s377 = int_to_ptr.vmem [resolvable:$true] %s376
          %382 = dma.hbm_to_vmem [thread:$0]  %s7, 512, %s377, [#allocation5], 128, 128, 8
        $region36: #{_lambda_.4} parent=11 // pred_fallthru
          _
        // Predicated region
        $region37: #{_lambda_.4} parent=11 // pred_check
          %p383 = pneg %p220
        $region38: #{_lambda_.4} parent=11 // pred_check_branch
          %385 = sbr.rel (%p383) target = $region40
        $region39: #{_lambda_.4} parent=11 // pred_region
          _
        $region40: #{_lambda_.4} parent=11 // pred_fallthru
          _
        // Predicated region
        $region41: #{_lambda_.4} parent=11 // pred_check
          %p386 = pneg %p241
        $region42: #{_lambda_.4} parent=11 // pred_check_branch
          %388 = sbr.rel (%p386) target = $region44
        $region43: #{_lambda_.4} parent=11 // pred_region
          %s390 = ssub.s32 512, 512
          %391 = vsyncadd [#allocation5], %s390
          %s392 = sshll.u32 [#allocation6], 4
          %s393 = int_to_ptr.vmem [resolvable:$true] %s392
          %398 = dma.hbm_to_vmem [thread:$0]  %s9, 512, %s393, [#allocation5], 128, 128, 8
        $region44: #{_lambda_.4} parent=11 // pred_fallthru
          _
        // Predicated region
        $region45: #{_lambda_.4} parent=11 // pred_check
          %p399 = pneg %p262
        $region46: #{_lambda_.4} parent=11 // pred_check_branch
          %401 = sbr.rel (%p399) target = $region48
        $region47: #{_lambda_.4} parent=11 // pred_region
          _
        $region48: #{_lambda_.4} parent=11 // pred_fallthru
          _
        // Predicated region
        $region49: #{_lambda_.4} parent=11 // pred_check
          %p402 = pneg %p283
        $region50: #{_lambda_.4} parent=11 // pred_check_branch
          %404 = sbr.rel (%p402) target = $region52
        $region51: #{_lambda_.4} parent=11 // pred_region
          _
        $region52: #{_lambda_.4} parent=11 // pred_fallthru
          _
        // Predicated region
        $region53: #{_lambda_.4} parent=11 // pred_check
          %p405 = pneg %p304
        $region54: #{_lambda_.4} parent=11 // pred_check_branch
          %407 = sbr.rel (%p405) target = $region56
        $region55: #{_lambda_.4} parent=11 // pred_region
          _
        $region56: #{_lambda_.4} parent=11 // pred_fallthru
          _
      $region12: #{_lambda_.4} parent=5 // pred_fallthru
        _
      %p408 = scmp.lt.s32.totalorder %s21, 2
      // Predicated region
      $region57: #{_lambda_.4} parent=5 // pred_check
        %p409 = pneg %p408
      $region58: #{_lambda_.4} parent=5 // pred_check_branch
        %411 = sbr.rel (%p409) target = $region60
      $region59: #{_lambda_.4} parent=5 // pred_region
        // Predicated region
        $region61: #{_lambda_.4} parent=59 // pred_check
          %p412 = pneg %p41
        $region62: #{_lambda_.4} parent=59 // pred_check_branch
          %414 = sbr.rel (%p412) target = $region64
        $region63: #{_lambda_.4} parent=59 // pred_region
          %p415 = scmp.lt.s32.totalorder %s21, 1
          %s416 = scalar_select %p415, %s21, 1
          %s417 = smul.addr %s416, 8
          %s418 = scalar_lea.vmem %s0, %s417
        $region64: #{_lambda_.4} parent=59 // pred_fallthru
          _
        // Predicated region
        $region65: #{_lambda_.4} parent=59 // pred_check
          %p419 = pneg %p67
        $region66: #{_lambda_.4} parent=59 // pred_check_branch
          %421 = sbr.rel (%p419) target = $region68
        $region67: #{_lambda_.4} parent=59 // pred_region
          %p422 = scmp.lt.s32.totalorder %s21, 1
          %s423 = scalar_select %p422, %s21, 1
          %s424 = smul.addr %s423, 8
          %s425 = scalar_lea.vmem %s1, %s424
        $region68: #{_lambda_.4} parent=59 // pred_fallthru
          _
      $region60: #{_lambda_.4} parent=5 // pred_fallthru
        _
      %p426 = scmp.le.s32.totalorder 1, %s21
      %p427 = scmp.lt.s32.totalorder %s21, 3
      %p428 = pnand %p426, %p427
      %p429 = pneg %p428
      // Predicated region
      $region69: #{_lambda_.4} parent=5 // pred_check
        _
      $region70: #{_lambda_.4} parent=5 // pred_check_branch
        %431 = sbr.rel (%p428) target = $region72
      $region71: #{_lambda_.4} parent=5 // pred_region
        %s432 = ssub.s32 %s21, 1
        // Predicated region
        $region73: #{_lambda_.4} parent=71 // pred_check
          %p433 = pneg %p157
        $region74: #{_lambda_.4} parent=71 // pred_check_branch
          %435 = sbr.rel (%p433) target = $region76
        $region75: #{_lambda_.4} parent=71 // pred_region
          %436 = dma.done [#allocation3], 512
        $region76: #{_lambda_.4} parent=71 // pred_fallthru
          _
        // Predicated region
        $region77: #{_lambda_.4} parent=71 // pred_check
          %p437 = pneg %p199
        $region78: #{_lambda_.4} parent=71 // pred_check_branch
          %439 = sbr.rel (%p437) target = $region80
        $region79: #{_lambda_.4} parent=71 // pred_region
          %440 = dma.done [#allocation5], 512
        $region80: #{_lambda_.4} parent=71 // pred_fallthru
          _
        // Predicated region
        $region81: #{_lambda_.4} parent=71 // pred_check
          %p441 = pneg %p241
        $region82: #{_lambda_.4} parent=71 // pred_check_branch
          %443 = sbr.rel (%p441) target = $region84
        $region83: #{_lambda_.4} parent=71 // pred_region
          %444 = dma.done [#allocation5], 512
        $region84: #{_lambda_.4} parent=71 // pred_fallthru
          _
        %p445 = scmp.lt.s32.totalorder %s26, 1
        %s446 = scalar_select %p445, %s26, 1
        %s447 = smul.addr %s446, 8
        %s448 = scalar_lea.vmem %s0, %s447
        %p449 = pneg %p47
        %p450 = pneg %p44
        %p451 = scmp.lt.s32.totalorder %s26, 1
        %s452 = scalar_select %p451, %s26, 1
        %s453 = smul.addr %s452, 8
        %s454 = scalar_lea.vmem %s1, %s453
        %p455 = pneg %p73
        %p456 = pneg %p70
        %p457 = pneg %p94
        %p458 = pneg %p91
        %p459 = pneg %p115
        %p460 = pneg %p112
        %p461 = pneg %p136
        %p462 = pneg %p133
        %p463 = pneg %p157
        %p464 = pneg %p154
        %p465 = pneg %p178
        %p466 = pneg %p175
        %p467 = pneg %p199
        %p468 = pneg %p196
        %p469 = pneg %p220
        %p470 = pneg %p217
        %p471 = pneg %p241
        %p472 = pneg %p238
        %p473 = pneg %p262
        %p474 = pneg %p259
        %p475 = pneg %p283
        %p476 = pneg %p280
        %p477 = pneg %p304
        %p478 = pneg %p301
        %p479 = pneg %p330
        %p480 = pneg %p327
        %p481 = scmp.lt.s32.totalorder %s26, 1
        %s482 = scalar_select %p481, %s26, 1
        %s483 = smul.addr %s482, 8
        %s484 = scalar_lea.vmem %s13, %s483
        %p485 = scmp.lt.s32.totalorder %s26, 1
        %s486 = scalar_select %p485, %s26, 1
        %s487 = smul.addr %s486, 8
        %s488 = scalar_lea.vmem %s0, %s487
        %p489 = scmp.lt.s32.totalorder %s26, 1
        %s490 = scalar_select %p489, %s26, 1
        %s491 = smul.addr %s490, 8
        %s492 = scalar_lea.vmem %s1, %s491
        %p493 = scmp.lt.s32.totalorder %s26, 1
        %s494 = scalar_select %p493, %s26, 1
        %s495 = smul.addr %s494, 8
        %s496 = scalar_lea.vmem %s13, %s495
        %v497 = vld [vmem:[%s488] sm:$0xff]
        %v498 = vld [vmem:[%s492] sm:$0xff]
        %v499 = vld [vmem:[%s3] sm:$0xff]
        %v500 = vld [vmem:[%s3 + $0x8] sm:$0xff]
        %v501 = vld [vmem:[%s3 + $0x10] sm:$0xff]
        %v502 = vld [vmem:[%s3 + $0x18] sm:$0xff]
        %v503 = vld [vmem:[%s4] sm:$0x1]
        %v505 = vlaneseq
        %v506 = vshrl.u32 %v505, 7
        %v507 = vsub.s32 0, %v506
        %v508 = vrot.slane %v503, %v507
        %vm510 = vcmask 261120
        %v512 = vsel %vm510, %v497, 0
        %514 = vmatprep.subr.mxu0 0.0
        %515 = vmatpush1.msra.mxu0 0.0
        %516 = vmatprep.subr.mxu0 0.0
        %517 = vmatpush1.msra.mxu0 0.0
        %518 = vmatprep.subr.mxu0 0.0
        %519 = vmatpush1.msra.mxu0 0.0
        %520 = vmatprep.subr.mxu0 0.0
        %521 = vmatpush1.msra.mxu0 0.0
        %522 = vmatprep.subr.mxu0 0.0
        %523 = vmatpush1.msra.mxu0 0.0
        %524 = vmatprep.subr.mxu0 0.0
        %525 = vmatpush1.msra.mxu0 0.0
        %526 = vmatprep.subr.mxu0 0.0
        %527 = vmatpush1.msra.mxu0 0.0
        %528 = vmatprep.subr.mxu0 0.0
        %529 = vmatpush1.msra.mxu0 0.0
        %530 = vmatprep.subr.mxu0 0.0
        %531 = vmatpush1.msra.mxu0 0.0
        %532 = vmatprep.subr.mxu0 0.0
        %533 = vmatpush1.msra.mxu0 0.0
        %534 = vmatprep.subr.mxu0 0.0
        %535 = vmatpush1.msra.mxu0 0.0
        %536 = vmatprep.subr.mxu0 0.0
        %537 = vmatpush1.msra.mxu0 0.0
        %538 = vmatprep.subr.mxu0 0.0
        %539 = vmatpush1.msra.mxu0 %v502
        %540 = vmatprep.subr.mxu0 0.0
        %541 = vmatpush1.msra.mxu0 %v501
        %542 = vmatprep.subr.mxu0 0.0
        %543 = vmatpush1.msra.mxu0 %v500
        %544 = vmatprep.subr.mxu0 0.0
        %545 = vmatpush1.msra.mxu0 %v499
        %546 = vmatprep.subr.mxu0 0.0
        %547 = vmatpush2.msra.mxu0 0.0
        %548 = vmatprep.subr.mxu0 0.0
        %549 = vmatpush2.msra.mxu0 0.0
        %550 = vmatprep.subr.mxu0 0.0
        %551 = vmatpush2.msra.mxu0 0.0
        %552 = vmatprep.subr.mxu0 0.0
        %553 = vmatpush2.msra.mxu0 0.0
        %554 = vmatprep.subr.mxu0 0.0
        %555 = vmatpush2.msra.mxu0 0.0
        %556 = vmatprep.subr.mxu0 0.0
        %557 = vmatpush2.msra.mxu0 0.0
        %558 = vmatprep.subr.mxu0 0.0
        %559 = vmatpush2.msra.mxu0 0.0
        %560 = vmatprep.subr.mxu0 0.0
        %561 = vmatpush2.msra.mxu0 0.0
        %562 = vmatprep.subr.mxu0 0.0
        %563 = vmatpush2.msra.mxu0 0.0
        %564 = vmatprep.subr.mxu0 0.0
        %565 = vmatpush2.msra.mxu0 0.0
        %566 = vmatprep.subr.mxu0 0.0
        %567 = vmatpush2.msra.mxu0 0.0
        %568 = vmatprep.subr.mxu0 0.0
        %569 = vmatpush2.msra.mxu0 0.0
        %570 = vmatprep.subr.mxu0 0.0
        %571 = vmatpush2.msra.mxu0 0.0
        %572 = vmatprep.subr.mxu0 0.0
        %573 = vmatpush2.msra.mxu0 0.0
        %574 = vmatprep.subr.mxu0 0.0
        %575 = vmatpush2.msra.mxu0 0.0
        %576 = vmatprep.subr.mxu0 0.0
        %577 = vmatpush2.msra.mxu0 0.0
        %578 = vmatprep.mubr.f32.mxu0 0.0
        %579 = vmatmul.mubr.f32.gmra.mxu0 %v512
        %v580 = vpop.f32.mrf.mxu0
        %v581 = vadd.f32 %v508, %v580
        %v582 = vpop.f32.mrf.mxu0
        %583 = vdwg.mxu0
        %v584 = vld [vmem:[#allocation2] sm:$0xff]
        %v585 = vld [vmem:[#allocation2 + $0x8] sm:$0xff]
        %v586 = vld [vmem:[#allocation2 + $0x10] sm:$0xff]
        %v587 = vld [vmem:[#allocation2 + $0x18] sm:$0xff]
        %v588 = vld [vmem:[%s6] sm:$0x1]
        %v590 = vlaneseq
        %v591 = vshrl.u32 %v590, 7
        %v592 = vsub.s32 0, %v591
        %v593 = vrot.slane %v588, %v592
        %v596 = vsel %vm510, %v498, 0
        %598 = vmatprep.subr.mxu0 0.0
        %599 = vmatpush1.msra.mxu0 0.0
        %600 = vmatprep.subr.mxu0 0.0
        %601 = vmatpush1.msra.mxu0 0.0
        %602 = vmatprep.subr.mxu0 0.0
        %603 = vmatpush1.msra.mxu0 0.0
        %604 = vmatprep.subr.mxu0 0.0
        %605 = vmatpush1.msra.mxu0 0.0
        %606 = vmatprep.subr.mxu0 0.0
        %607 = vmatpush1.msra.mxu0 0.0
        %608 = vmatprep.subr.mxu0 0.0
        %609 = vmatpush1.msra.mxu0 0.0
        %610 = vmatprep.subr.mxu0 0.0
        %611 = vmatpush1.msra.mxu0 0.0
        %612 = vmatprep.subr.mxu0 0.0
        %613 = vmatpush1.msra.mxu0 0.0
        %614 = vmatprep.subr.mxu0 0.0
        %615 = vmatpush1.msra.mxu0 0.0
        %616 = vmatprep.subr.mxu0 0.0
        %617 = vmatpush1.msra.mxu0 0.0
        %618 = vmatprep.subr.mxu0 0.0
        %619 = vmatpush1.msra.mxu0 0.0
        %620 = vmatprep.subr.mxu0 0.0
        %621 = vmatpush1.msra.mxu0 0.0
        %622 = vmatprep.subr.mxu0 0.0
        %623 = vmatpush1.msra.mxu0 %v587
        %624 = vmatprep.subr.mxu0 0.0
        %625 = vmatpush1.msra.mxu0 %v586
        %626 = vmatprep.subr.mxu0 0.0
        %627 = vmatpush1.msra.mxu0 %v585
        %628 = vmatprep.subr.mxu0 0.0
        %629 = vmatpush1.msra.mxu0 %v584
        %630 = vmatprep.subr.mxu0 0.0
        %631 = vmatpush2.msra.mxu0 0.0
        %632 = vmatprep.subr.mxu0 0.0
        %633 = vmatpush2.msra.mxu0 0.0
        %634 = vmatprep.subr.mxu0 0.0
        %635 = vmatpush2.msra.mxu0 0.0
        %636 = vmatprep.subr.mxu0 0.0
        %637 = vmatpush2.msra.mxu0 0.0
        %638 = vmatprep.subr.mxu0 0.0
        %639 = vmatpush2.msra.mxu0 0.0
        %640 = vmatprep.subr.mxu0 0.0
        %641 = vmatpush2.msra.mxu0 0.0
        %642 = vmatprep.subr.mxu0 0.0
        %643 = vmatpush2.msra.mxu0 0.0
        %644 = vmatprep.subr.mxu0 0.0
        %645 = vmatpush2.msra.mxu0 0.0
        %646 = vmatprep.subr.mxu0 0.0
        %647 = vmatpush2.msra.mxu0 0.0
        %648 = vmatprep.subr.mxu0 0.0
        %649 = vmatpush2.msra.mxu0 0.0
        %650 = vmatprep.subr.mxu0 0.0
        %651 = vmatpush2.msra.mxu0 0.0
        %652 = vmatprep.subr.mxu0 0.0
        %653 = vmatpush2.msra.mxu0 0.0
        %654 = vmatprep.subr.mxu0 0.0
        %655 = vmatpush2.msra.mxu0 0.0
        %656 = vmatprep.subr.mxu0 0.0
        %657 = vmatpush2.msra.mxu0 0.0
        %658 = vmatprep.subr.mxu0 0.0
        %659 = vmatpush2.msra.mxu0 0.0
        %660 = vmatprep.subr.mxu0 0.0
        %661 = vmatpush2.msra.mxu0 0.0
        %662 = vmatprep.mubr.f32.mxu0 0.0
        %663 = vmatmul.mubr.f32.gmra.mxu0 %v596
        %v664 = vpop.f32.mrf.mxu0
        %v665 = vadd.f32 %v593, %v664
        %v666 = vpop.f32.mrf.mxu0
        %667 = vdwg.mxu0
        %v668 = vld [vmem:[#allocation4] sm:$0xff]
        %v669 = vld [vmem:[#allocation4 + $0x8] sm:$0xff]
        %v670 = vld [vmem:[#allocation4 + $0x10] sm:$0xff]
        %v671 = vld [vmem:[#allocation4 + $0x18] sm:$0xff]
        %v672 = vld [vmem:[%s8] sm:$0x1]
        %v674 = vlaneseq
        %v675 = vshrl.u32 %v674, 7
        %v676 = vsub.s32 0, %v675
        %v677 = vrot.slane %v672, %v676
        %679 = vmatprep.subr.mxu0 0.0
        %680 = vmatpush1.msra.mxu0 0.0
        %681 = vmatprep.subr.mxu0 0.0
        %682 = vmatpush1.msra.mxu0 0.0
        %683 = vmatprep.subr.mxu0 0.0
        %684 = vmatpush1.msra.mxu0 0.0
        %685 = vmatprep.subr.mxu0 0.0
        %686 = vmatpush1.msra.mxu0 0.0
        %687 = vmatprep.subr.mxu0 0.0
        %688 = vmatpush1.msra.mxu0 0.0
        %689 = vmatprep.subr.mxu0 0.0
        %690 = vmatpush1.msra.mxu0 0.0
        %691 = vmatprep.subr.mxu0 0.0
        %692 = vmatpush1.msra.mxu0 0.0
        %693 = vmatprep.subr.mxu0 0.0
        %694 = vmatpush1.msra.mxu0 0.0
        %695 = vmatprep.subr.mxu0 0.0
        %696 = vmatpush1.msra.mxu0 0.0
        %697 = vmatprep.subr.mxu0 0.0
        %698 = vmatpush1.msra.mxu0 0.0
        %699 = vmatprep.subr.mxu0 0.0
        %700 = vmatpush1.msra.mxu0 0.0
        %701 = vmatprep.subr.mxu0 0.0
        %702 = vmatpush1.msra.mxu0 0.0
        %703 = vmatprep.subr.mxu0 0.0
        %704 = vmatpush1.msra.mxu0 %v671
        %705 = vmatprep.subr.mxu0 0.0
        %706 = vmatpush1.msra.mxu0 %v670
        %707 = vmatprep.subr.mxu0 0.0
        %708 = vmatpush1.msra.mxu0 %v669
        %709 = vmatprep.subr.mxu0 0.0
        %710 = vmatpush1.msra.mxu0 %v668
        %711 = vmatprep.subr.mxu0 0.0
        %712 = vmatpush2.msra.mxu0 0.0
        %713 = vmatprep.subr.mxu0 0.0
        %714 = vmatpush2.msra.mxu0 0.0
        %715 = vmatprep.subr.mxu0 0.0
        %716 = vmatpush2.msra.mxu0 0.0
        %717 = vmatprep.subr.mxu0 0.0
        %718 = vmatpush2.msra.mxu0 0.0
        %719 = vmatprep.subr.mxu0 0.0
        %720 = vmatpush2.msra.mxu0 0.0
        %721 = vmatprep.subr.mxu0 0.0
        %722 = vmatpush2.msra.mxu0 0.0
        %723 = vmatprep.subr.mxu0 0.0
        %724 = vmatpush2.msra.mxu0 0.0
        %725 = vmatprep.subr.mxu0 0.0
        %726 = vmatpush2.msra.mxu0 0.0
        %727 = vmatprep.subr.mxu0 0.0
        %728 = vmatpush2.msra.mxu0 0.0
        %729 = vmatprep.subr.mxu0 0.0
        %730 = vmatpush2.msra.mxu0 0.0
        %731 = vmatprep.subr.mxu0 0.0
        %732 = vmatpush2.msra.mxu0 0.0
        %733 = vmatprep.subr.mxu0 0.0
        %734 = vmatpush2.msra.mxu0 0.0
        %735 = vmatprep.subr.mxu0 0.0
        %736 = vmatpush2.msra.mxu0 0.0
        %737 = vmatprep.subr.mxu0 0.0
        %738 = vmatpush2.msra.mxu0 0.0
        %739 = vmatprep.subr.mxu0 0.0
        %740 = vmatpush2.msra.mxu0 0.0
        %741 = vmatprep.subr.mxu0 0.0
        %742 = vmatpush2.msra.mxu0 0.0
        %743 = vmatprep.mubr.f32.mxu0 0.0
        %744 = vmatmul.mubr.f32.gmra.mxu0 %v596
        %v745 = vpop.f32.mrf.mxu0
        %v746 = vadd.f32 %v677, %v745
        %v747 = vpop.f32.mrf.mxu0
        %748 = vdwg.mxu0
        %v749 = vld [vmem:[%s2] sm:$0xff]
        %vm750 = vcmask 64512
        %v752 = vsel %vm750, %v581, 0
        %v755 = vsel %vm750, %v665, 0
        %757 = vmatprep.subr.mxu0 0.0
        %758 = vmatpush1.xpose.msra.mxu0 0.0
        %759 = vmatprep.subr.mxu0 0.0
        %760 = vmatpush1.xpose.msra.mxu0 0.0
        %761 = vmatprep.subr.mxu0 0.0
        %762 = vmatpush1.xpose.msra.mxu0 0.0
        %763 = vmatprep.subr.mxu0 0.0
        %764 = vmatpush1.xpose.msra.mxu0 0.0
        %765 = vmatprep.subr.mxu0 0.0
        %766 = vmatpush1.xpose.msra.mxu0 0.0
        %767 = vmatprep.subr.mxu0 0.0
        %768 = vmatpush1.xpose.msra.mxu0 0.0
        %769 = vmatprep.subr.mxu0 0.0
        %770 = vmatpush1.xpose.msra.mxu0 0.0
        %771 = vmatprep.subr.mxu0 0.0
        %772 = vmatpush1.xpose.msra.mxu0 0.0
        %773 = vmatprep.subr.mxu0 0.0
        %774 = vmatpush1.xpose.msra.mxu0 0.0
        %775 = vmatprep.subr.mxu0 0.0
        %776 = vmatpush1.xpose.msra.mxu0 0.0
        %777 = vmatprep.subr.mxu0 0.0
        %778 = vmatpush1.xpose.msra.mxu0 0.0
        %779 = vmatprep.subr.mxu0 0.0
        %780 = vmatpush1.xpose.msra.mxu0 0.0
        %781 = vmatprep.subr.mxu0 0.0
        %782 = vmatpush1.xpose.msra.mxu0 0.0
        %783 = vmatprep.subr.mxu0 0.0
        %784 = vmatpush1.xpose.msra.mxu0 0.0
        %785 = vmatprep.subr.mxu0 0.0
        %786 = vmatpush1.xpose.msra.mxu0 0.0
        %787 = vmatprep.subr.mxu0 0.0
        %788 = vmatpush1.xpose.msra.mxu0 %v755
        %789 = vmatprep.subr.mxu0 0.0
        %790 = vmatpush2.xpose.msra.mxu0 0.0
        %791 = vmatprep.subr.mxu0 0.0
        %792 = vmatpush2.xpose.msra.mxu0 0.0
        %793 = vmatprep.subr.mxu0 0.0
        %794 = vmatpush2.xpose.msra.mxu0 0.0
        %795 = vmatprep.subr.mxu0 0.0
        %796 = vmatpush2.xpose.msra.mxu0 0.0
        %797 = vmatprep.subr.mxu0 0.0
        %798 = vmatpush2.xpose.msra.mxu0 0.0
        %799 = vmatprep.subr.mxu0 0.0
        %800 = vmatpush2.xpose.msra.mxu0 0.0
        %801 = vmatprep.subr.mxu0 0.0
        %802 = vmatpush2.xpose.msra.mxu0 0.0
        %803 = vmatprep.subr.mxu0 0.0
        %804 = vmatpush2.xpose.msra.mxu0 0.0
        %805 = vmatprep.subr.mxu0 0.0
        %806 = vmatpush2.xpose.msra.mxu0 0.0
        %807 = vmatprep.subr.mxu0 0.0
        %808 = vmatpush2.xpose.msra.mxu0 0.0
        %809 = vmatprep.subr.mxu0 0.0
        %810 = vmatpush2.xpose.msra.mxu0 0.0
        %811 = vmatprep.subr.mxu0 0.0
        %812 = vmatpush2.xpose.msra.mxu0 0.0
        %813 = vmatprep.subr.mxu0 0.0
        %814 = vmatpush2.xpose.msra.mxu0 0.0
        %815 = vmatprep.subr.mxu0 0.0
        %816 = vmatpush2.xpose.msra.mxu0 0.0
        %817 = vmatprep.subr.mxu0 0.0
        %818 = vmatpush2.xpose.msra.mxu0 0.0
        %819 = vmatprep.subr.mxu0 0.0
        %820 = vmatpush2.xpose.msra.mxu0 0.0
        %821 = vmatprep.mubr.f32.mxu0 0.0
        %822 = vmatmul.mubr.f32.gmra.mxu0 %v752
        %v823 = vpop.f32.mrf.mxu0
        %v824 = vadd.f32 0.0, %v823
        %v825 = vpop.f32.mrf.mxu0
        %826 = vdwg.mxu0
        %v827 = vmul.f32 %v824, 0.35355338
        %v828 = vadd.f32 %v827, %v749
        %v829 = vsel %vm750, %v828, -inf
        %830 = vmax.xlane.f32.xlu0 %v829
        %v831 = vpop.xlane.xlu0 %830
        %v832 = vsub.f32 %v828, %v831
        %v833 = vmul.f32 %v832, 1.442695
        %v834 = vpow.pop %v833
        %v835 = vsel %vm750, %v834, 0.0
        %836 = vadd.xlane.f32.xlu0 %v835
        %v837 = vpop.xlane.xlu0 %836
        %v838 = vrcp.pop %v837
        %v839 = vmul.f32 %v834, %v838
        %v841 = vsel %vm750, %v839, 0
        %843 = vmatprep.subr.mxu0 0.0
        %844 = vmatpush1.msra.mxu0 0.0
        %845 = vmatprep.subr.mxu0 0.0
        %846 = vmatpush1.msra.mxu0 0.0
        %847 = vmatprep.subr.mxu0 0.0
        %848 = vmatpush1.msra.mxu0 0.0
        %849 = vmatprep.subr.mxu0 0.0
        %850 = vmatpush1.msra.mxu0 0.0
        %851 = vmatprep.subr.mxu0 0.0
        %852 = vmatpush1.msra.mxu0 0.0
        %853 = vmatprep.subr.mxu0 0.0
        %854 = vmatpush1.msra.mxu0 0.0
        %855 = vmatprep.subr.mxu0 0.0
        %856 = vmatpush1.msra.mxu0 0.0
        %857 = vmatprep.subr.mxu0 0.0
        %858 = vmatpush1.msra.mxu0 0.0
        %859 = vmatprep.subr.mxu0 0.0
        %860 = vmatpush1.msra.mxu0 0.0
        %861 = vmatprep.subr.mxu0 0.0
        %862 = vmatpush1.msra.mxu0 0.0
        %863 = vmatprep.subr.mxu0 0.0
        %864 = vmatpush1.msra.mxu0 0.0
        %865 = vmatprep.subr.mxu0 0.0
        %866 = vmatpush1.msra.mxu0 0.0
        %867 = vmatprep.subr.mxu0 0.0
        %868 = vmatpush1.msra.mxu0 0.0
        %869 = vmatprep.subr.mxu0 0.0
        %870 = vmatpush1.msra.mxu0 0.0
        %871 = vmatprep.subr.mxu0 0.0
        %872 = vmatpush1.msra.mxu0 0.0
        %873 = vmatprep.subr.mxu0 0.0
        %874 = vmatpush1.msra.mxu0 %v746
        %875 = vmatprep.subr.mxu0 0.0
        %876 = vmatpush2.msra.mxu0 0.0
        %877 = vmatprep.subr.mxu0 0.0
        %878 = vmatpush2.msra.mxu0 0.0
        %879 = vmatprep.subr.mxu0 0.0
        %880 = vmatpush2.msra.mxu0 0.0
        %881 = vmatprep.subr.mxu0 0.0
        %882 = vmatpush2.msra.mxu0 0.0
        %883 = vmatprep.subr.mxu0 0.0
        %884 = vmatpush2.msra.mxu0 0.0
        %885 = vmatprep.subr.mxu0 0.0
        %886 = vmatpush2.msra.mxu0 0.0
        %887 = vmatprep.subr.mxu0 0.0
        %888 = vmatpush2.msra.mxu0 0.0
        %889 = vmatprep.subr.mxu0 0.0
        %890 = vmatpush2.msra.mxu0 0.0
        %891 = vmatprep.subr.mxu0 0.0
        %892 = vmatpush2.msra.mxu0 0.0
        %893 = vmatprep.subr.mxu0 0.0
        %894 = vmatpush2.msra.mxu0 0.0
        %895 = vmatprep.subr.mxu0 0.0
        %896 = vmatpush2.msra.mxu0 0.0
        %897 = vmatprep.subr.mxu0 0.0
        %898 = vmatpush2.msra.mxu0 0.0
        %899 = vmatprep.subr.mxu0 0.0
        %900 = vmatpush2.msra.mxu0 0.0
        %901 = vmatprep.subr.mxu0 0.0
        %902 = vmatpush2.msra.mxu0 0.0
        %903 = vmatprep.subr.mxu0 0.0
        %904 = vmatpush2.msra.mxu0 0.0
        %905 = vmatprep.subr.mxu0 0.0
        %906 = vmatpush2.msra.mxu0 0.0
        %907 = vmatprep.mubr.f32.mxu0 0.0
        %908 = vmatmul.mubr.f32.gmra.mxu0 %v841
        %v909 = vpop.f32.mrf.mxu0
        %v910 = vadd.f32 0.0, %v909
        %v911 = vpop.f32.mrf.mxu0
        %912 = vdwg.mxu0
        %913 = vrot.lane.b32.xlu0 %v581, 120
        %v914 = vpop.permute.xlu0 %913
        %915 = vrot.lane.b32.xlu0 %v665, 120
        %v916 = vpop.permute.xlu0 %915
        %v917 = vsel %vm750, %v914, 0
        %v919 = vsel %vm750, %v916, 0
        %921 = vmatprep.subr.mxu0 0.0
        %922 = vmatpush1.xpose.msra.mxu0 0.0
        %923 = vmatprep.subr.mxu0 0.0
        %924 = vmatpush1.xpose.msra.mxu0 0.0
        %925 = vmatprep.subr.mxu0 0.0
        %926 = vmatpush1.xpose.msra.mxu0 0.0
        %927 = vmatprep.subr.mxu0 0.0
        %928 = vmatpush1.xpose.msra.mxu0 0.0
        %929 = vmatprep.subr.mxu0 0.0
        %930 = vmatpush1.xpose.msra.mxu0 0.0
        %931 = vmatprep.subr.mxu0 0.0
        %932 = vmatpush1.xpose.msra.mxu0 0.0
        %933 = vmatprep.subr.mxu0 0.0
        %934 = vmatpush1.xpose.msra.mxu0 0.0
        %935 = vmatprep.subr.mxu0 0.0
        %936 = vmatpush1.xpose.msra.mxu0 0.0
        %937 = vmatprep.subr.mxu0 0.0
        %938 = vmatpush1.xpose.msra.mxu0 0.0
        %939 = vmatprep.subr.mxu0 0.0
        %940 = vmatpush1.xpose.msra.mxu0 0.0
        %941 = vmatprep.subr.mxu0 0.0
        %942 = vmatpush1.xpose.msra.mxu0 0.0
        %943 = vmatprep.subr.mxu0 0.0
        %944 = vmatpush1.xpose.msra.mxu0 0.0
        %945 = vmatprep.subr.mxu0 0.0
        %946 = vmatpush1.xpose.msra.mxu0 0.0
        %947 = vmatprep.subr.mxu0 0.0
        %948 = vmatpush1.xpose.msra.mxu0 0.0
        %949 = vmatprep.subr.mxu0 0.0
        %950 = vmatpush1.xpose.msra.mxu0 0.0
        %951 = vmatprep.subr.mxu0 0.0
        %952 = vmatpush1.xpose.msra.mxu0 %v919
        %953 = vmatprep.subr.mxu0 0.0
        %954 = vmatpush2.xpose.msra.mxu0 0.0
        %955 = vmatprep.subr.mxu0 0.0
        %956 = vmatpush2.xpose.msra.mxu0 0.0
        %957 = vmatprep.subr.mxu0 0.0
        %958 = vmatpush2.xpose.msra.mxu0 0.0
        %959 = vmatprep.subr.mxu0 0.0
        %960 = vmatpush2.xpose.msra.mxu0 0.0
        %961 = vmatprep.subr.mxu0 0.0
        %962 = vmatpush2.xpose.msra.mxu0 0.0
        %963 = vmatprep.subr.mxu0 0.0
        %964 = vmatpush2.xpose.msra.mxu0 0.0
        %965 = vmatprep.subr.mxu0 0.0
        %966 = vmatpush2.xpose.msra.mxu0 0.0
        %967 = vmatprep.subr.mxu0 0.0
        %968 = vmatpush2.xpose.msra.mxu0 0.0
        %969 = vmatprep.subr.mxu0 0.0
        %970 = vmatpush2.xpose.msra.mxu0 0.0
        %971 = vmatprep.subr.mxu0 0.0
        %972 = vmatpush2.xpose.msra.mxu0 0.0
        %973 = vmatprep.subr.mxu0 0.0
        %974 = vmatpush2.xpose.msra.mxu0 0.0
        %975 = vmatprep.subr.mxu0 0.0
        %976 = vmatpush2.xpose.msra.mxu0 0.0
        %977 = vmatprep.subr.mxu0 0.0
        %978 = vmatpush2.xpose.msra.mxu0 0.0
        %979 = vmatprep.subr.mxu0 0.0
        %980 = vmatpush2.xpose.msra.mxu0 0.0
        %981 = vmatprep.subr.mxu0 0.0
        %982 = vmatpush2.xpose.msra.mxu0 0.0
        %983 = vmatprep.subr.mxu0 0.0
        %984 = vmatpush2.xpose.msra.mxu0 0.0
        %985 = vmatprep.mubr.f32.mxu0 0.0
        %986 = vmatmul.mubr.f32.gmra.mxu0 %v917
        %v987 = vpop.f32.mrf.mxu0
        %v988 = vadd.f32 0.0, %v987
        %v989 = vpop.f32.mrf.mxu0
        %990 = vdwg.mxu0
        %v991 = vmul.f32 %v988, 0.35355338
        %v992 = vadd.f32 %v991, %v749
        %v993 = vsel %vm750, %v992, -inf
        %994 = vmax.xlane.f32.xlu0 %v993
        %v995 = vpop.xlane.xlu0 %994
        %v996 = vsub.f32 %v992, %v995
        %v997 = vmul.f32 %v996, 1.442695
        %v998 = vpow.pop %v997
        %v999 = vsel %vm750, %v998, 0.0
        %1000 = vadd.xlane.f32.xlu0 %v999
        %v1001 = vpop.xlane.xlu0 %1000
        %v1002 = vrcp.pop %v1001
        %v1003 = vmul.f32 %v998, %v1002
        %1005 = vrot.lane.b32.xlu0 %v746, 120
        %v1006 = vpop.permute.xlu0 %1005
        %v1009 = vsel %vm750, %v1003, 0
        %1011 = vmatprep.subr.mxu0 0.0
        %1012 = vmatpush1.msra.mxu0 0.0
        %1013 = vmatprep.subr.mxu0 0.0
        %1014 = vmatpush1.msra.mxu0 0.0
        %1015 = vmatprep.subr.mxu0 0.0
        %1016 = vmatpush1.msra.mxu0 0.0
        %1017 = vmatprep.subr.mxu0 0.0
        %1018 = vmatpush1.msra.mxu0 0.0
        %1019 = vmatprep.subr.mxu0 0.0
        %1020 = vmatpush1.msra.mxu0 0.0
        %1021 = vmatprep.subr.mxu0 0.0
        %1022 = vmatpush1.msra.mxu0 0.0
        %1023 = vmatprep.subr.mxu0 0.0
        %1024 = vmatpush1.msra.mxu0 0.0
        %1025 = vmatprep.subr.mxu0 0.0
        %1026 = vmatpush1.msra.mxu0 0.0
        %1027 = vmatprep.subr.mxu0 0.0
        %1028 = vmatpush1.msra.mxu0 0.0
        %1029 = vmatprep.subr.mxu0 0.0
        %1030 = vmatpush1.msra.mxu0 0.0
        %1031 = vmatprep.subr.mxu0 0.0
        %1032 = vmatpush1.msra.mxu0 0.0
        %1033 = vmatprep.subr.mxu0 0.0
        %1034 = vmatpush1.msra.mxu0 0.0
        %1035 = vmatprep.subr.mxu0 0.0
        %1036 = vmatpush1.msra.mxu0 0.0
        %1037 = vmatprep.subr.mxu0 0.0
        %1038 = vmatpush1.msra.mxu0 0.0
        %1039 = vmatprep.subr.mxu0 0.0
        %1040 = vmatpush1.msra.mxu0 0.0
        %1041 = vmatprep.subr.mxu0 0.0
        %1042 = vmatpush1.msra.mxu0 %v1006
        %1043 = vmatprep.subr.mxu0 0.0
        %1044 = vmatpush2.msra.mxu0 0.0
        %1045 = vmatprep.subr.mxu0 0.0
        %1046 = vmatpush2.msra.mxu0 0.0
        %1047 = vmatprep.subr.mxu0 0.0
        %1048 = vmatpush2.msra.mxu0 0.0
        %1049 = vmatprep.subr.mxu0 0.0
        %1050 = vmatpush2.msra.mxu0 0.0
        %1051 = vmatprep.subr.mxu0 0.0
        %1052 = vmatpush2.msra.mxu0 0.0
        %1053 = vmatprep.subr.mxu0 0.0
        %1054 = vmatpush2.msra.mxu0 0.0
        %1055 = vmatprep.subr.mxu0 0.0
        %1056 = vmatpush2.msra.mxu0 0.0
        %1057 = vmatprep.subr.mxu0 0.0
        %1058 = vmatpush2.msra.mxu0 0.0
        %1059 = vmatprep.subr.mxu0 0.0
        %1060 = vmatpush2.msra.mxu0 0.0
        %1061 = vmatprep.subr.mxu0 0.0
        %1062 = vmatpush2.msra.mxu0 0.0
        %1063 = vmatprep.subr.mxu0 0.0
        %1064 = vmatpush2.msra.mxu0 0.0
        %1065 = vmatprep.subr.mxu0 0.0
        %1066 = vmatpush2.msra.mxu0 0.0
        %1067 = vmatprep.subr.mxu0 0.0
        %1068 = vmatpush2.msra.mxu0 0.0
        %1069 = vmatprep.subr.mxu0 0.0
        %1070 = vmatpush2.msra.mxu0 0.0
        %1071 = vmatprep.subr.mxu0 0.0
        %1072 = vmatpush2.msra.mxu0 0.0
        %1073 = vmatprep.subr.mxu0 0.0
        %1074 = vmatpush2.msra.mxu0 0.0
        %1075 = vmatprep.mubr.f32.mxu0 0.0
        %1076 = vmatmul.mubr.f32.gmra.mxu0 %v1009
        %v1077 = vpop.f32.mrf.mxu0
        %v1078 = vadd.f32 0.0, %v1077
        %v1079 = vpop.f32.mrf.mxu0
        %1080 = vdwg.mxu0
        %1081 = vrot.lane.b32.xlu0 %v581, 112
        %v1082 = vpop.permute.xlu0 %1081
        %1083 = vrot.lane.b32.xlu0 %v665, 112
        %v1084 = vpop.permute.xlu0 %1083
        %v1085 = vsel %vm750, %v1082, 0
        %v1087 = vsel %vm750, %v1084, 0
        %1089 = vmatprep.subr.mxu0 0.0
        %1090 = vmatpush1.xpose.msra.mxu0 0.0
        %1091 = vmatprep.subr.mxu0 0.0
        %1092 = vmatpush1.xpose.msra.mxu0 0.0
        %1093 = vmatprep.subr.mxu0 0.0
        %1094 = vmatpush1.xpose.msra.mxu0 0.0
        %1095 = vmatprep.subr.mxu0 0.0
        %1096 = vmatpush1.xpose.msra.mxu0 0.0
        %1097 = vmatprep.subr.mxu0 0.0
        %1098 = vmatpush1.xpose.msra.mxu0 0.0
        %1099 = vmatprep.subr.mxu0 0.0
        %1100 = vmatpush1.xpose.msra.mxu0 0.0
        %1101 = vmatprep.subr.mxu0 0.0
        %1102 = vmatpush1.xpose.msra.mxu0 0.0
        %1103 = vmatprep.subr.mxu0 0.0
        %1104 = vmatpush1.xpose.msra.mxu0 0.0
        %1105 = vmatprep.subr.mxu0 0.0
        %1106 = vmatpush1.xpose.msra.mxu0 0.0
        %1107 = vmatprep.subr.mxu0 0.0
        %1108 = vmatpush1.xpose.msra.mxu0 0.0
        %1109 = vmatprep.subr.mxu0 0.0
        %1110 = vmatpush1.xpose.msra.mxu0 0.0
        %1111 = vmatprep.subr.mxu0 0.0
        %1112 = vmatpush1.xpose.msra.mxu0 0.0
        %1113 = vmatprep.subr.mxu0 0.0
        %1114 = vmatpush1.xpose.msra.mxu0 0.0
        %1115 = vmatprep.subr.mxu0 0.0
        %1116 = vmatpush1.xpose.msra.mxu0 0.0
        %1117 = vmatprep.subr.mxu0 0.0
        %1118 = vmatpush1.xpose.msra.mxu0 0.0
        %1119 = vmatprep.subr.mxu0 0.0
        %1120 = vmatpush1.xpose.msra.mxu0 %v1087
        %1121 = vmatprep.subr.mxu0 0.0
        %1122 = vmatpush2.xpose.msra.mxu0 0.0
        %1123 = vmatprep.subr.mxu0 0.0
        %1124 = vmatpush2.xpose.msra.mxu0 0.0
        %1125 = vmatprep.subr.mxu0 0.0
        %1126 = vmatpush2.xpose.msra.mxu0 0.0
        %1127 = vmatprep.subr.mxu0 0.0
        %1128 = vmatpush2.xpose.msra.mxu0 0.0
        %1129 = vmatprep.subr.mxu0 0.0
        %1130 = vmatpush2.xpose.msra.mxu0 0.0
        %1131 = vmatprep.subr.mxu0 0.0
        %1132 = vmatpush2.xpose.msra.mxu0 0.0
        %1133 = vmatprep.subr.mxu0 0.0
        %1134 = vmatpush2.xpose.msra.mxu0 0.0
        %1135 = vmatprep.subr.mxu0 0.0
        %1136 = vmatpush2.xpose.msra.mxu0 0.0
        %1137 = vmatprep.subr.mxu0 0.0
        %1138 = vmatpush2.xpose.msra.mxu0 0.0
        %1139 = vmatprep.subr.mxu0 0.0
        %1140 = vmatpush2.xpose.msra.mxu0 0.0
        %1141 = vmatprep.subr.mxu0 0.0
        %1142 = vmatpush2.xpose.msra.mxu0 0.0
        %1143 = vmatprep.subr.mxu0 0.0
        %1144 = vmatpush2.xpose.msra.mxu0 0.0
        %1145 = vmatprep.subr.mxu0 0.0
        %1146 = vmatpush2.xpose.msra.mxu0 0.0
        %1147 = vmatprep.subr.mxu0 0.0
        %1148 = vmatpush2.xpose.msra.mxu0 0.0
        %1149 = vmatprep.subr.mxu0 0.0
        %1150 = vmatpush2.xpose.msra.mxu0 0.0
        %1151 = vmatprep.subr.mxu0 0.0
        %1152 = vmatpush2.xpose.msra.mxu0 0.0
        %1153 = vmatprep.mubr.f32.mxu0 0.0
        %1154 = vmatmul.mubr.f32.gmra.mxu0 %v1085
        %v1155 = vpop.f32.mrf.mxu0
        %v1156 = vadd.f32 0.0, %v1155
        %v1157 = vpop.f32.mrf.mxu0
        %1158 = vdwg.mxu0
        %v1159 = vmul.f32 %v1156, 0.35355338
        %v1160 = vadd.f32 %v1159, %v749
        %v1161 = vsel %vm750, %v1160, -inf
        %1162 = vmax.xlane.f32.xlu0 %v1161
        %v1163 = vpop.xlane.xlu0 %1162
        %v1164 = vsub.f32 %v1160, %v1163
        %v1165 = vmul.f32 %v1164, 1.442695
        %v1166 = vpow.pop %v1165
        %v1167 = vsel %vm750, %v1166, 0.0
        %1168 = vadd.xlane.f32.xlu0 %v1167
        %v1169 = vpop.xlane.xlu0 %1168
        %v1170 = vrcp.pop %v1169
        %v1171 = vmul.f32 %v1166, %v1170
        %1172 = vrot.lane.b32.xlu0 %v746, 112
        %v1173 = vpop.permute.xlu0 %1172
        %v1176 = vsel %vm750, %v1171, 0
        %1178 = vmatprep.subr.mxu0 0.0
        %1179 = vmatpush1.msra.mxu0 0.0
        %1180 = vmatprep.subr.mxu0 0.0
        %1181 = vmatpush1.msra.mxu0 0.0
        %1182 = vmatprep.subr.mxu0 0.0
        %1183 = vmatpush1.msra.mxu0 0.0
        %1184 = vmatprep.subr.mxu0 0.0
        %1185 = vmatpush1.msra.mxu0 0.0
        %1186 = vmatprep.subr.mxu0 0.0
        %1187 = vmatpush1.msra.mxu0 0.0
        %1188 = vmatprep.subr.mxu0 0.0
        %1189 = vmatpush1.msra.mxu0 0.0
        %1190 = vmatprep.subr.mxu0 0.0
        %1191 = vmatpush1.msra.mxu0 0.0
        %1192 = vmatprep.subr.mxu0 0.0
        %1193 = vmatpush1.msra.mxu0 0.0
        %1194 = vmatprep.subr.mxu0 0.0
        %1195 = vmatpush1.msra.mxu0 0.0
        %1196 = vmatprep.subr.mxu0 0.0
        %1197 = vmatpush1.msra.mxu0 0.0
        %1198 = vmatprep.subr.mxu0 0.0
        %1199 = vmatpush1.msra.mxu0 0.0
        %1200 = vmatprep.subr.mxu0 0.0
        %1201 = vmatpush1.msra.mxu0 0.0
        %1202 = vmatprep.subr.mxu0 0.0
        %1203 = vmatpush1.msra.mxu0 0.0
        %1204 = vmatprep.subr.mxu0 0.0
        %1205 = vmatpush1.msra.mxu0 0.0
        %1206 = vmatprep.subr.mxu0 0.0
        %1207 = vmatpush1.msra.mxu0 0.0
        %1208 = vmatprep.subr.mxu0 0.0
        %1209 = vmatpush1.msra.mxu0 %v1173
        %1210 = vmatprep.subr.mxu0 0.0
        %1211 = vmatpush2.msra.mxu0 0.0
        %1212 = vmatprep.subr.mxu0 0.0
        %1213 = vmatpush2.msra.mxu0 0.0
        %1214 = vmatprep.subr.mxu0 0.0
        %1215 = vmatpush2.msra.mxu0 0.0
        %1216 = vmatprep.subr.mxu0 0.0
        %1217 = vmatpush2.msra.mxu0 0.0
        %1218 = vmatprep.subr.mxu0 0.0
        %1219 = vmatpush2.msra.mxu0 0.0
        %1220 = vmatprep.subr.mxu0 0.0
        %1221 = vmatpush2.msra.mxu0 0.0
        %1222 = vmatprep.subr.mxu0 0.0
        %1223 = vmatpush2.msra.mxu0 0.0
        %1224 = vmatprep.subr.mxu0 0.0
        %1225 = vmatpush2.msra.mxu0 0.0
        %1226 = vmatprep.subr.mxu0 0.0
        %1227 = vmatpush2.msra.mxu0 0.0
        %1228 = vmatprep.subr.mxu0 0.0
        %1229 = vmatpush2.msra.mxu0 0.0
        %1230 = vmatprep.subr.mxu0 0.0
        %1231 = vmatpush2.msra.mxu0 0.0
        %1232 = vmatprep.subr.mxu0 0.0
        %1233 = vmatpush2.msra.mxu0 0.0
        %1234 = vmatprep.subr.mxu0 0.0
        %1235 = vmatpush2.msra.mxu0 0.0
        %1236 = vmatprep.subr.mxu0 0.0
        %1237 = vmatpush2.msra.mxu0 0.0
        %1238 = vmatprep.subr.mxu0 0.0
        %1239 = vmatpush2.msra.mxu0 0.0
        %1240 = vmatprep.subr.mxu0 0.0
        %1241 = vmatpush2.msra.mxu0 0.0
        %1242 = vmatprep.mubr.f32.mxu0 0.0
        %1243 = vmatmul.mubr.f32.gmra.mxu0 %v1176
        %v1244 = vpop.f32.mrf.mxu0
        %v1245 = vadd.f32 0.0, %v1244
        %v1246 = vpop.f32.mrf.mxu0
        %1247 = vdwg.mxu0
        %1248 = vrot.lane.b32.xlu0 %v581, 104
        %v1249 = vpop.permute.xlu0 %1248
        %1250 = vrot.lane.b32.xlu0 %v665, 104
        %v1251 = vpop.permute.xlu0 %1250
        %v1252 = vsel %vm750, %v1249, 0
        %v1254 = vsel %vm750, %v1251, 0
        %1256 = vmatprep.subr.mxu0 0.0
        %1257 = vmatpush1.xpose.msra.mxu0 0.0
        %1258 = vmatprep.subr.mxu0 0.0
        %1259 = vmatpush1.xpose.msra.mxu0 0.0
        %1260 = vmatprep.subr.mxu0 0.0
        %1261 = vmatpush1.xpose.msra.mxu0 0.0
        %1262 = vmatprep.subr.mxu0 0.0
        %1263 = vmatpush1.xpose.msra.mxu0 0.0
        %1264 = vmatprep.subr.mxu0 0.0
        %1265 = vmatpush1.xpose.msra.mxu0 0.0
        %1266 = vmatprep.subr.mxu0 0.0
        %1267 = vmatpush1.xpose.msra.mxu0 0.0
        %1268 = vmatprep.subr.mxu0 0.0
        %1269 = vmatpush1.xpose.msra.mxu0 0.0
        %1270 = vmatprep.subr.mxu0 0.0
        %1271 = vmatpush1.xpose.msra.mxu0 0.0
        %1272 = vmatprep.subr.mxu0 0.0
        %1273 = vmatpush1.xpose.msra.mxu0 0.0
        %1274 = vmatprep.subr.mxu0 0.0
        %1275 = vmatpush1.xpose.msra.mxu0 0.0
        %1276 = vmatprep.subr.mxu0 0.0
        %1277 = vmatpush1.xpose.msra.mxu0 0.0
        %1278 = vmatprep.subr.mxu0 0.0
        %1279 = vmatpush1.xpose.msra.mxu0 0.0
        %1280 = vmatprep.subr.mxu0 0.0
        %1281 = vmatpush1.xpose.msra.mxu0 0.0
        %1282 = vmatprep.subr.mxu0 0.0
        %1283 = vmatpush1.xpose.msra.mxu0 0.0
        %1284 = vmatprep.subr.mxu0 0.0
        %1285 = vmatpush1.xpose.msra.mxu0 0.0
        %1286 = vmatprep.subr.mxu0 0.0
        %1287 = vmatpush1.xpose.msra.mxu0 %v1254
        %1288 = vmatprep.subr.mxu0 0.0
        %1289 = vmatpush2.xpose.msra.mxu0 0.0
        %1290 = vmatprep.subr.mxu0 0.0
        %1291 = vmatpush2.xpose.msra.mxu0 0.0
        %1292 = vmatprep.subr.mxu0 0.0
        %1293 = vmatpush2.xpose.msra.mxu0 0.0
        %1294 = vmatprep.subr.mxu0 0.0
        %1295 = vmatpush2.xpose.msra.mxu0 0.0
        %1296 = vmatprep.subr.mxu0 0.0
        %1297 = vmatpush2.xpose.msra.mxu0 0.0
        %1298 = vmatprep.subr.mxu0 0.0
        %1299 = vmatpush2.xpose.msra.mxu0 0.0
        %1300 = vmatprep.subr.mxu0 0.0
        %1301 = vmatpush2.xpose.msra.mxu0 0.0
        %1302 = vmatprep.subr.mxu0 0.0
        %1303 = vmatpush2.xpose.msra.mxu0 0.0
        %1304 = vmatprep.subr.mxu0 0.0
        %1305 = vmatpush2.xpose.msra.mxu0 0.0
        %1306 = vmatprep.subr.mxu0 0.0
        %1307 = vmatpush2.xpose.msra.mxu0 0.0
        %1308 = vmatprep.subr.mxu0 0.0
        %1309 = vmatpush2.xpose.msra.mxu0 0.0
        %1310 = vmatprep.subr.mxu0 0.0
        %1311 = vmatpush2.xpose.msra.mxu0 0.0
        %1312 = vmatprep.subr.mxu0 0.0
        %1313 = vmatpush2.xpose.msra.mxu0 0.0
        %1314 = vmatprep.subr.mxu0 0.0
        %1315 = vmatpush2.xpose.msra.mxu0 0.0
        %1316 = vmatprep.subr.mxu0 0.0
        %1317 = vmatpush2.xpose.msra.mxu0 0.0
        %1318 = vmatprep.subr.mxu0 0.0
        %1319 = vmatpush2.xpose.msra.mxu0 0.0
        %1320 = vmatprep.mubr.f32.mxu0 0.0
        %1321 = vmatmul.mubr.f32.gmra.mxu0 %v1252
        %v1322 = vpop.f32.mrf.mxu0
        %v1323 = vadd.f32 0.0, %v1322
        %v1324 = vpop.f32.mrf.mxu0
        %1325 = vdwg.mxu0
        %v1326 = vmul.f32 %v1323, 0.35355338
        %v1327 = vadd.f32 %v1326, %v749
        %v1328 = vsel %vm750, %v1327, -inf
        %1329 = vmax.xlane.f32.xlu0 %v1328
        %v1330 = vpop.xlane.xlu0 %1329
        %v1331 = vsub.f32 %v1327, %v1330
        %v1332 = vmul.f32 %v1331, 1.442695
        %v1333 = vpow.pop %v1332
        %v1334 = vsel %vm750, %v1333, 0.0
        %1335 = vadd.xlane.f32.xlu0 %v1334
        %v1336 = vpop.xlane.xlu0 %1335
        %v1337 = vrcp.pop %v1336
        %v1338 = vmul.f32 %v1333, %v1337
        %1339 = vrot.lane.b32.xlu0 %v746, 104
        %v1340 = vpop.permute.xlu0 %1339
        %v1343 = vsel %vm750, %v1338, 0
        %1345 = vmatprep.subr.mxu0 0.0
        %1346 = vmatpush1.msra.mxu0 0.0
        %1347 = vmatprep.subr.mxu0 0.0
        %1348 = vmatpush1.msra.mxu0 0.0
        %1349 = vmatprep.subr.mxu0 0.0
        %1350 = vmatpush1.msra.mxu0 0.0
        %1351 = vmatprep.subr.mxu0 0.0
        %1352 = vmatpush1.msra.mxu0 0.0
        %1353 = vmatprep.subr.mxu0 0.0
        %1354 = vmatpush1.msra.mxu0 0.0
        %1355 = vmatprep.subr.mxu0 0.0
        %1356 = vmatpush1.msra.mxu0 0.0
        %1357 = vmatprep.subr.mxu0 0.0
        %1358 = vmatpush1.msra.mxu0 0.0
        %1359 = vmatprep.subr.mxu0 0.0
        %1360 = vmatpush1.msra.mxu0 0.0
        %1361 = vmatprep.subr.mxu0 0.0
        %1362 = vmatpush1.msra.mxu0 0.0
        %1363 = vmatprep.subr.mxu0 0.0
        %1364 = vmatpush1.msra.mxu0 0.0
        %1365 = vmatprep.subr.mxu0 0.0
        %1366 = vmatpush1.msra.mxu0 0.0
        %1367 = vmatprep.subr.mxu0 0.0
        %1368 = vmatpush1.msra.mxu0 0.0
        %1369 = vmatprep.subr.mxu0 0.0
        %1370 = vmatpush1.msra.mxu0 0.0
        %1371 = vmatprep.subr.mxu0 0.0
        %1372 = vmatpush1.msra.mxu0 0.0
        %1373 = vmatprep.subr.mxu0 0.0
        %1374 = vmatpush1.msra.mxu0 0.0
        %1375 = vmatprep.subr.mxu0 0.0
        %1376 = vmatpush1.msra.mxu0 %v1340
        %1377 = vmatprep.subr.mxu0 0.0
        %1378 = vmatpush2.msra.mxu0 0.0
        %1379 = vmatprep.subr.mxu0 0.0
        %1380 = vmatpush2.msra.mxu0 0.0
        %1381 = vmatprep.subr.mxu0 0.0
        %1382 = vmatpush2.msra.mxu0 0.0
        %1383 = vmatprep.subr.mxu0 0.0
        %1384 = vmatpush2.msra.mxu0 0.0
        %1385 = vmatprep.subr.mxu0 0.0
        %1386 = vmatpush2.msra.mxu0 0.0
        %1387 = vmatprep.subr.mxu0 0.0
        %1388 = vmatpush2.msra.mxu0 0.0
        %1389 = vmatprep.subr.mxu0 0.0
        %1390 = vmatpush2.msra.mxu0 0.0
        %1391 = vmatprep.subr.mxu0 0.0
        %1392 = vmatpush2.msra.mxu0 0.0
        %1393 = vmatprep.subr.mxu0 0.0
        %1394 = vmatpush2.msra.mxu0 0.0
        %1395 = vmatprep.subr.mxu0 0.0
        %1396 = vmatpush2.msra.mxu0 0.0
        %1397 = vmatprep.subr.mxu0 0.0
        %1398 = vmatpush2.msra.mxu0 0.0
        %1399 = vmatprep.subr.mxu0 0.0
        %1400 = vmatpush2.msra.mxu0 0.0
        %1401 = vmatprep.subr.mxu0 0.0
        %1402 = vmatpush2.msra.mxu0 0.0
        %1403 = vmatprep.subr.mxu0 0.0
        %1404 = vmatpush2.msra.mxu0 0.0
        %1405 = vmatprep.subr.mxu0 0.0
        %1406 = vmatpush2.msra.mxu0 0.0
        %1407 = vmatprep.subr.mxu0 0.0
        %1408 = vmatpush2.msra.mxu0 0.0
        %1409 = vmatprep.mubr.f32.mxu0 0.0
        %1410 = vmatmul.mubr.f32.gmra.mxu0 %v1343
        %v1411 = vpop.f32.mrf.mxu0
        %v1412 = vadd.f32 0.0, %v1411
        %v1413 = vpop.f32.mrf.mxu0
        %1414 = vdwg.mxu0
        %1416 = vrot.lane.b32.xlu0 %v1078, 8
        %v1417 = vpop.permute.xlu0 %1416
        %1420 = vrot.lane.b32.xlu0 %v1245, 16
        %v1421 = vpop.permute.xlu0 %1420
        %1424 = vrot.lane.b32.xlu0 %v1412, 24
        %v1425 = vpop.permute.xlu0 %1424
        %v1427 = vsel %vm750, %v910, %v1417
        %vm1428 = vcmask 130048
        %v1429 = vsel %vm1428, %v1427, %v1421
        %vm1430 = vcmask 195584
        %v1431 = vsel %vm1430, %v1429, %v1425
        %v1432 = vld [vmem:[#allocation6] sm:$0xff]
        %v1433 = vld [vmem:[#allocation6 + $0x8] sm:$0xff]
        %v1434 = vld [vmem:[#allocation6 + $0x10] sm:$0xff]
        %v1435 = vld [vmem:[#allocation6 + $0x18] sm:$0xff]
        %v1436 = vld [vmem:[%s10] sm:$0x1]
        %v1438 = vlaneseq
        %v1439 = vshrl.u32 %v1438, 7
        %v1440 = vsub.s32 0, %v1439
        %v1441 = vrot.slane %v1436, %v1440
        %v1444 = vsel %vm510, %v1431, 0
        %1446 = vmatprep.subr.mxu0 0.0
        %1447 = vmatpush1.msra.mxu0 0.0
        %1448 = vmatprep.subr.mxu0 0.0
        %1449 = vmatpush1.msra.mxu0 0.0
        %1450 = vmatprep.subr.mxu0 0.0
        %1451 = vmatpush1.msra.mxu0 0.0
        %1452 = vmatprep.subr.mxu0 0.0
        %1453 = vmatpush1.msra.mxu0 0.0
        %1454 = vmatprep.subr.mxu0 0.0
        %1455 = vmatpush1.msra.mxu0 0.0
        %1456 = vmatprep.subr.mxu0 0.0
        %1457 = vmatpush1.msra.mxu0 0.0
        %1458 = vmatprep.subr.mxu0 0.0
        %1459 = vmatpush1.msra.mxu0 0.0
        %1460 = vmatprep.subr.mxu0 0.0
        %1461 = vmatpush1.msra.mxu0 0.0
        %1462 = vmatprep.subr.mxu0 0.0
        %1463 = vmatpush1.msra.mxu0 0.0
        %1464 = vmatprep.subr.mxu0 0.0
        %1465 = vmatpush1.msra.mxu0 0.0
        %1466 = vmatprep.subr.mxu0 0.0
        %1467 = vmatpush1.msra.mxu0 0.0
        %1468 = vmatprep.subr.mxu0 0.0
        %1469 = vmatpush1.msra.mxu0 0.0
        %1470 = vmatprep.subr.mxu0 0.0
        %1471 = vmatpush1.msra.mxu0 %v1435
        %1472 = vmatprep.subr.mxu0 0.0
        %1473 = vmatpush1.msra.mxu0 %v1434
        %1474 = vmatprep.subr.mxu0 0.0
        %1475 = vmatpush1.msra.mxu0 %v1433
        %1476 = vmatprep.subr.mxu0 0.0
        %1477 = vmatpush1.msra.mxu0 %v1432
        %1478 = vmatprep.subr.mxu0 0.0
        %1479 = vmatpush2.msra.mxu0 0.0
        %1480 = vmatprep.subr.mxu0 0.0
        %1481 = vmatpush2.msra.mxu0 0.0
        %1482 = vmatprep.subr.mxu0 0.0
        %1483 = vmatpush2.msra.mxu0 0.0
        %1484 = vmatprep.subr.mxu0 0.0
        %1485 = vmatpush2.msra.mxu0 0.0
        %1486 = vmatprep.subr.mxu0 0.0
        %1487 = vmatpush2.msra.mxu0 0.0
        %1488 = vmatprep.subr.mxu0 0.0
        %1489 = vmatpush2.msra.mxu0 0.0
        %1490 = vmatprep.subr.mxu0 0.0
        %1491 = vmatpush2.msra.mxu0 0.0
        %1492 = vmatprep.subr.mxu0 0.0
        %1493 = vmatpush2.msra.mxu0 0.0
        %1494 = vmatprep.subr.mxu0 0.0
        %1495 = vmatpush2.msra.mxu0 0.0
        %1496 = vmatprep.subr.mxu0 0.0
        %1497 = vmatpush2.msra.mxu0 0.0
        %1498 = vmatprep.subr.mxu0 0.0
        %1499 = vmatpush2.msra.mxu0 0.0
        %1500 = vmatprep.subr.mxu0 0.0
        %1501 = vmatpush2.msra.mxu0 0.0
        %1502 = vmatprep.subr.mxu0 0.0
        %1503 = vmatpush2.msra.mxu0 0.0
        %1504 = vmatprep.subr.mxu0 0.0
        %1505 = vmatpush2.msra.mxu0 0.0
        %1506 = vmatprep.subr.mxu0 0.0
        %1507 = vmatpush2.msra.mxu0 0.0
        %1508 = vmatprep.subr.mxu0 0.0
        %1509 = vmatpush2.msra.mxu0 0.0
        %1510 = vmatprep.mubr.f32.mxu0 0.0
        %1511 = vmatmul.mubr.f32.gmra.mxu0 %v1444
        %v1512 = vpop.f32.mrf.mxu0
        %v1513 = vadd.f32 %v1441, %v1512
        %v1514 = vpop.f32.mrf.mxu0
        %1515 = vdwg.mxu0
        %v1516 = vadd.f32 %v497, %v1513
        %v1517 = vsel %vm510, %v1516, 0.0
        %1518 = vadd.xlane.f32.xlu0 %v1517
        %v1519 = vpop.xlane.xlu0 %1518
        %v1520 = vrcp.pop 32.0
        %v1521 = vmul.f32 %v1519, %v1520
        %v1522 = vsub.f32 %v1516, %v1521
        %v1523 = vmul.f32 %v1522, %v1522
        %v1524 = vsel %vm510, %v1523, 0.0
        %1525 = vadd.xlane.f32.xlu0 %v1524
        %v1526 = vpop.xlane.xlu0 %1525
        %v1527 = vmul.f32 %v1526, %v1520
        %v1528 = vadd.f32 %v1527, 1e-05
        %v1529 = vrsqrt.pop %v1528
        %v1530 = vmul.f32 %v1522, %v1529
        %v1531 = vld [vmem:[%s11] sm:$0x1]
        %v1533 = vlaneseq
        %v1534 = vshrl.u32 %v1533, 7
        %v1535 = vsub.s32 0, %v1534
        %v1536 = vrot.slane %v1531, %v1535
        %v1538 = vmul.f32 %v1530, %v1536
        %v1539 = vld [vmem:[%s12] sm:$0x1]
        %v1541 = vlaneseq
        %v1542 = vshrl.u32 %v1541, 7
        %v1543 = vsub.s32 0, %v1542
        %v1544 = vrot.slane %v1539, %v1543
        %v1546 = vadd.f32 %v1538, %v1544
        %1547 = vst.msk [vmem:[%s496] sm:$0xff] %vm510, %v1546
        %p1548 = scmp.lt.s32.totalorder %s26, 1
        %s1549 = scalar_select %p1548, %s26, 1
        %s1550 = smul.addr %s1549, 8
        %s1551 = scalar_lea.vmem %s13, %s1550
        // Predicated region
        $region85: #{_lambda_.4} parent=71 // pred_check
          %p1552 = pneg %p327
        $region86: #{_lambda_.4} parent=71 // pred_check_branch
          %1554 = sbr.rel (%p1552) target = $region88
        $region87: #{_lambda_.4} parent=71 // pred_region
          _
        $region88: #{_lambda_.4} parent=71 // pred_fallthru
          _
      $region72: #{_lambda_.4} parent=5 // pred_fallthru
        _
      %p1555 = scmp.le.s32.totalorder 2, %s21
      // Predicated region
      $region89: #{_lambda_.4} parent=5 // pred_check
        %p1556 = pneg %p1555
      $region90: #{_lambda_.4} parent=5 // pred_check_branch
        %1558 = sbr.rel (%p1556) target = $region92
      $region91: #{_lambda_.4} parent=5 // pred_region
        %s1559 = ssub.s32 %s21, 2
        // Predicated region
        $region93: #{_lambda_.4} parent=91 // pred_check
          %p1560 = pneg %p333
        $region94: #{_lambda_.4} parent=91 // pred_check_branch
          %1562 = sbr.rel (%p1560) target = $region96
        $region95: #{_lambda_.4} parent=91 // pred_region
          %p1563 = scmp.lt.s32.totalorder %s27, 1
          %s1564 = scalar_select %p1563, %s27, 1
          %s1565 = smul.addr %s1564, 8
          %s1566 = scalar_lea.vmem %s13, %s1565
        $region96: #{_lambda_.4} parent=91 // pred_fallthru
          _
      $region92: #{_lambda_.4} parent=5 // pred_fallthru
        _
    $region6: #{_lambda_.4} parent=1 // loop_footer
      %s25 = sadd.s32 1, %s21
    $region7: #{_lambda_.4} parent=1 // loop_footer_branch
      %20 = sbr.rel target = $region3
    $region8: #{_lambda_.4} parent=1 // loop_exit
      _
    %1567 = vsyncpa [#allocation3], 1
    %s1568 = scalar_lea.sflag [#allocation3], 1
    %1569 = vsyncpa %s1568, 1
    %1570 = vsyncpa [#allocation5], 1

</llo_original>
